<compile_context>
chip_gen: v6e
topology: v6e:2x2x1
jax: 0.10.0
libtpu: 0.0.40
codegen_flags: <defaults>
</compile_context>

<pallas_src>
import functools

import jax
import jax.numpy as jnp
from jax.experimental import pallas as pl
from jax.experimental.pallas import tpu as pltpu


# ----------------------------------------------------------------------------
# Pallas kernel: fused post-grid_sample pipeline
# ----------------------------------------------------------------------------
def _evaluate_kernel(feat_ref, warp_ref, offx_ref, offy_ref, lx_ref, ly_ref,
                     fx_ref, fy_ref, *, group_size, roll_steps, w_dim, h_dim):
    C = feat_ref.shape[1]
    n_off = warp_ref.shape[1]
    shifts = (0,) + tuple(int(s) % C for s in roll_steps)

    feat = feat_ref[0]                                     # (C, TS)

    def group_mean(wv, j, gsz, s):
        # mean over channels k in [j, j+gsz) of -|feat[k] - wv[(k - s) % C]|
        # (wv rolled by +s along channels, as torch.roll(warped, s, dim=1)).
        start = (j - s) % C
        if start + gsz <= C:                               # no wrap inside the group
            d = -jnp.abs(feat[j:j + gsz] - wv[start:start + gsz])
            return jnp.sum(d, axis=0, keepdims=True) / float(gsz)
        n1 = C - start                                     # wrap: split in two slices
        d1 = -jnp.abs(feat[j:j + n1] - wv[start:C])
        d2 = -jnp.abs(feat[j + n1:j + gsz] - wv[0:gsz - n1])
        return (jnp.sum(d1, axis=0, keepdims=True) +
                jnp.sum(d2, axis=0, keepdims=True)) / float(gsz)

    # online (flash-style) softmax over offset candidates, temperature 1000
    m = denom = wx = wy = None
    for n in range(n_off):
        wv = warp_ref[0, n]                                # (C, TS)
        best = None
        for s in shifts:
            for j in range(0, C, group_size):
                gsz = min(group_size, C - j)
                gm = group_mean(wv, j, gsz, s)             # (1, TS)
                best = gm if best is None else jnp.maximum(best, gm)
        ox = offx_ref[0, n:n + 1]                          # (1, TS)
        oy = offy_ref[0, n:n + 1]
        if m is None:
            m, denom, wx, wy = best, jnp.ones_like(best), ox, oy
        else:
            m_new = jnp.maximum(m, best)
            scale = jnp.exp((m - m_new) * 1000.0)
            e = jnp.exp((best - m_new) * 1000.0)
            denom = denom * scale + e
            wx = wx * scale + ox * e
            wy = wy * scale + oy * e
            m = m_new

    inv = 1.0 / denom
    wx = wx * inv
    wy = wy * inv

    lx = lx_ref[0]                                         # (1, TS)
    ly = ly_ref[0]
    # single full-block (lane-dense) stores
    fx_ref[0] = jnp.clip(wx + lx, 0.0, w_dim - 1.0) - lx
    fy_ref[0] = jnp.clip(wy + ly, 0.0, h_dim - 1.0) - ly


# ----------------------------------------------------------------------------
# XLA prologue: clamp + normalize coords, fp16 grid rounding, bilinear warp
# ----------------------------------------------------------------------------
def _prepare_inputs(features, offset_x, offset_y, left_x, left_y):
    f32 = jnp.float32
    B, C, H, W = features.shape
    N = offset_x.shape[1]
    HW = H * W

    feats = features.astype(f32)
    offx = offset_x.astype(f32)
    offy = offset_y.astype(f32)
    lx = left_x.astype(f32)[:B]                            # (B, 1, H, W)
    ly = left_y.astype(f32)[:B]

    # right_* in pixel coordinates, clamped to the image (torch.clamp)
    rx = jnp.clip(lx + offx, 0.0, W - 1.0)                 # (B, N, H, W)
    ry = jnp.clip(ly + offy, 0.0, H - 1.0)

    # normalize to [-1,1], round through fp16 (grid.half()), back to pixels
    gx = ((rx - (W - 1) / 2.0) / ((W - 1) / 2.0)).astype(jnp.float16).astype(f32)
    gy = ((ry - (H - 1) / 2.0) / ((H - 1) / 2.0)).astype(jnp.float16).astype(f32)
    px = jnp.clip((gx + 1.0) * 0.5 * (W - 1), 0.0, W - 1.0)
    py = jnp.clip((gy + 1.0) * 0.5 * (H - 1), 0.0, H - 1.0)

    x0 = jnp.floor(px)
    y0 = jnp.floor(py)
    wx1 = (px - x0).reshape(B, N, 1, HW)
    wy1 = (py - y0).reshape(B, N, 1, HW)
    wx0 = 1.0 - wx1
    wy0 = 1.0 - wy1

    x0i = jnp.clip(x0, 0, W - 1).astype(jnp.int32)
    x1i = jnp.clip(x0 + 1.0, 0, W - 1).astype(jnp.int32)
    y0i = jnp.clip(y0, 0, H - 1).astype(jnp.int32)
    y1i = jnp.clip(y0 + 1.0, 0, H - 1).astype(jnp.int32)

    feats_flat = feats.reshape(B, C, HW)

    def gather(yi, xi):
        idx = (yi * W + xi).reshape(B, N, HW)
        g = jax.vmap(lambda f, i: jnp.take(f, i, axis=1))(feats_flat, idx)
        return jnp.transpose(g, (0, 2, 1, 3))              # (B, N, C, HW)

    warped = (gather(y0i, x0i) * wy0 * wx0 + gather(y0i, x1i) * wy0 * wx1 +
              gather(y1i, x0i) * wy1 * wx0 + gather(y1i, x1i) * wy1 * wx1)

    return (feats_flat, warped, offx.reshape(B, N, HW), offy.reshape(B, N, HW),
            lx.reshape(B, 1, HW), ly.reshape(B, 1, HW))


def _spatial_tile(hw, c, n_off, budget_bytes=8 * 1024 * 1024):
    # bytes per spatial element across double-buffered VMEM blocks:
    # features C + warped N*C + offsets 2N + left 2 + outputs 2, f32, x2 buffers
    per_elem = (c + n_off * c + 2 * n_off + 4) * 4 * 2
    max_tile = min(2048, max(128, (budget_bytes // per_elem) // 128 * 128))
    if hw <= max_tile:
        return hw                                          # full dim is always legal
    for t in range(max_tile, 127, -128):                   # multiple of 128 that divides hw
        if hw % t == 0:
            return t
    return hw


# ----------------------------------------------------------------------------
# Public wrapper: EvaluateZM.forward (group_size=12, roll_steps=(12, 24))
# ----------------------------------------------------------------------------
def evaluate_zm(features, offset_x, offset_y, left_x, left_y,
                group_size=12, roll_steps=(12, 24)):
    B, C, H, W = features.shape
    N = offset_x.shape[1]
    HW = H * W
    f32 = jnp.float32

    feats_flat, warped, offx, offy, lx, ly = _prepare_inputs(
        features, offset_x, offset_y, left_x, left_y)

    TS = _spatial_tile(HW, C, N)
    grid = (B, HW // TS)

    kern = functools.partial(
        _evaluate_kernel, group_size=int(group_size),
        roll_steps=tuple(int(s) for s in roll_steps),
        w_dim=float(W), h_dim=float(H))

    feat_spec = pl.BlockSpec((1, C, TS), lambda b, s: (b, 0, s))
    warp_spec = pl.BlockSpec((1, N, C, TS), lambda b, s: (b, 0, 0, s))
    off_spec = pl.BlockSpec((1, N, TS), lambda b, s: (b, 0, s))
    vec_spec = pl.BlockSpec((1, 1, TS), lambda b, s: (b, 0, s))

    final_x, final_y = pl.pallas_call(
        kern,
        out_shape=(jax.ShapeDtypeStruct((B, 1, HW), f32),
                   jax.ShapeDtypeStruct((B, 1, HW), f32)),
        grid=grid,
        in_specs=[feat_spec, warp_spec, off_spec, off_spec, vec_spec, vec_spec],
        out_specs=(vec_spec, vec_spec),
        compiler_params=pltpu.CompilerParams(
            dimension_semantics=("parallel", "parallel"),
            vmem_limit_bytes=32 * 1024 * 1024),
    )(feats_flat, warped, offx, offy, lx, ly)

    return final_x.reshape(B, 1, H, W), final_y.reshape(B, 1, H, W)


# ----------------------------------------------------------------------------
# Pure-JAX reference of the fused (post-grid_sample) part, for the self-test
# ----------------------------------------------------------------------------
def _evaluate_zm_reference(features, offset_x, offset_y, left_x, left_y,
                           group_size=12, roll_steps=(12, 24)):
    B, C, H, W = features.shape
    N = offset_x.shape[1]
    feats_flat, warped, offx, offy, lx, ly = _prepare_inputs(
        features, offset_x, offset_y, left_x, left_y)
    strengths = []
    for n in range(N):
        wv = warped[:, n]                                  # (B, C, HW)
        best = None
        for s in (0,) + tuple(roll_steps):
            d = -jnp.abs(feats_flat - jnp.roll(wv, s, axis=1))
            for j in range(0, C, group_size):
                m = jnp.mean(d[:, j:j + group_size], axis=1, keepdims=True)
                best = m if best is None else jnp.maximum(best, m)
        strengths.append(best)
    st = jnp.concatenate(strengths, axis=1)                # (B, N, HW)
    p = jax.nn.softmax(st * 1000.0, axis=1)
    wx = jnp.sum(offx * p, axis=1, keepdims=True)
    wy = jnp.sum(offy * p, axis=1, keepdims=True)
    fx = jnp.clip(wx + lx, 0.0, W - 1.0) - lx
    fy = jnp.clip(wy + ly, 0.0, H - 1.0) - ly
    return fx.reshape(B, 1, H, W), fy.reshape(B, 1, H, W)


if __name__ == "__main__":
    key = jax.random.PRNGKey(0)
    B, C, H, W = 2, 36, 16, 16     # C divisible by group_size=12 (3 groups)
    N = 4                          # number of candidate offsets

    k1, k2, k3 = jax.random.split(key, 3)
    features = jax.random.normal(k1, (B, C, H, W), jnp.float32)
    offset_x = jax.random.uniform(k2, (B, N, H, W), jnp.float32, -3.0, 3.0)
    offset_y = jax.random.uniform(k3, (B, N, H, W), jnp.float32, -3.0, 3.0)

    # left_x / left_y are the pixel-coordinate meshgrids (as in d2prl)
    xs = jnp.arange(W, dtype=jnp.float32)
    ys = jnp.arange(H, dtype=jnp.float32)
    left_x = jnp.broadcast_to(xs[None, None, None, :], (B, 1, H, W))
    left_y = jnp.broadcast_to(ys[None, None, :, None], (B, 1, H, W))

    final_x, final_y = jax.jit(evaluate_zm)(features, offset_x, offset_y,
                                            left_x, left_y)
    final_x, final_y = jax.block_until_ready((final_x, final_y))

    assert final_x.shape == (B, 1, H, W) and final_y.shape == (B, 1, H, W)

    # correctness check against a plain-JAX mirror of the torch math
    ref_x, ref_y = _evaluate_zm_reference(features, offset_x, offset_y,
                                          left_x, left_y)
    assert bool(jnp.allclose(final_x, ref_x, atol=2e-2, rtol=1e-3)), "final_x mismatch"
    assert bool(jnp.allclose(final_y, ref_y, atol=2e-2, rtol=1e-3)), "final_y mismatch"

    # final offsets must keep left+final inside the image (clamp semantics)
    assert bool(jnp.all(final_x + left_x >= -1e-4)) and bool(jnp.all(final_x + left_x <= W - 1 + 1e-4))
    assert bool(jnp.all(final_y + left_y >= -1e-4)) and bool(jnp.all(final_y + left_y <= H - 1 + 1e-4))

    print("KERNEL_OK")
</pallas_src>

<mosaic_0001>
module attributes {stable_mosaic.version = 11 : i64} {
  func.func @_evaluate_kernel(%arg0: i32, %arg1: i32, %arg2: memref<1x36x256xf32, #tpu.memory_space<vmem>>, %arg3: memref<1x4x36x256xf32, #tpu.memory_space<vmem>>, %arg4: memref<1x4x256xf32, #tpu.memory_space<vmem>>, %arg5: memref<1x4x256xf32, #tpu.memory_space<vmem>>, %arg6: memref<1x1x256xf32, #tpu.memory_space<vmem>>, %arg7: memref<1x1x256xf32, #tpu.memory_space<vmem>>, %arg8: memref<1x1x256xf32, #tpu.memory_space<vmem>>, %arg9: memref<1x1x256xf32, #tpu.memory_space<vmem>>) attributes {dimension_semantics = [#tpu.dimension_semantics<parallel>, #tpu.dimension_semantics<parallel>], iteration_bounds = array<i64: 2, 1>, scalar_prefetch = 0 : i64, scratch_operands = 0 : i64, tpu.core_type = #tpu.core_type<tc>, window_params = [{transform_indices = @transform_0, window_bounds = array<i64: 1, 36, 256>}, {transform_indices = @transform_1, window_bounds = array<i64: 1, 4, 36, 256>}, {transform_indices = @transform_2, window_bounds = array<i64: 1, 4, 256>}, {transform_indices = @transform_3, window_bounds = array<i64: 1, 4, 256>}, {transform_indices = @transform_4, window_bounds = array<i64: 1, 1, 256>}, {transform_indices = @transform_5, window_bounds = array<i64: 1, 1, 256>}, {transform_indices = @transform_6, window_bounds = array<i64: 1, 1, 256>}, {transform_indices = @transform_7, window_bounds = array<i64: 1, 1, 256>}]} {
    %c0 = arith.constant 0 : index
    %c0_0 = arith.constant 0 : index
    %c0_1 = arith.constant 0 : index
    %0 = vector.load %arg2[%c0, %c0_0, %c0_1] : memref<1x36x256xf32, #tpu.memory_space<vmem>>, vector<1x36x256xf32>
    %1 = vector.shape_cast %0 : vector<1x36x256xf32> to vector<36x256xf32>
    %c0_2 = arith.constant 0 : index
    %c0_3 = arith.constant 0 : index
    %c0_4 = arith.constant 0 : index
    %c0_5 = arith.constant 0 : index
    %2 = vector.load %arg3[%c0_2, %c0_3, %c0_4, %c0_5] : memref<1x4x36x256xf32, #tpu.memory_space<vmem>>, vector<1x1x36x256xf32>
    %3 = vector.shape_cast %2 : vector<1x1x36x256xf32> to vector<36x256xf32>
    %4 = vector.extract_strided_slice %1 {offsets = [0, 0], sizes = [12, 256], strides = [1, 1]} : vector<36x256xf32> to vector<12x256xf32>
    %5 = vector.extract_strided_slice %3 {offsets = [0, 0], sizes = [12, 256], strides = [1, 1]} : vector<36x256xf32> to vector<12x256xf32>
    %6 = arith.subf %4, %5 : vector<12x256xf32>
    %7 = math.absf %6 : vector<12x256xf32>
    %cst = arith.constant 0.000000e+00 : f32
    %8 = vector.broadcast %cst : f32 to vector<12x256xf32>
    %9 = arith.subf %8, %7 : vector<12x256xf32>
    %cst_6 = arith.constant dense<0.000000e+00> : vector<256xf32>
    %10 = vector.multi_reduction <add>, %9, %cst_6 [0] : vector<12x256xf32> to vector<256xf32>
    %11 = vector.shape_cast %10 : vector<256xf32> to vector<1x256xf32>
    %cst_7 = arith.constant 1.200000e+01 : f32
    %12 = vector.broadcast %cst_7 : f32 to vector<1x256xf32>
    %13 = arith.divf %11, %12 : vector<1x256xf32>
    %14 = vector.extract_strided_slice %1 {offsets = [12, 0], sizes = [12, 256], strides = [1, 1]} : vector<36x256xf32> to vector<12x256xf32>
    %15 = vector.extract_strided_slice %3 {offsets = [12, 0], sizes = [12, 256], strides = [1, 1]} : vector<36x256xf32> to vector<12x256xf32>
    %16 = arith.subf %14, %15 : vector<12x256xf32>
    %17 = math.absf %16 : vector<12x256xf32>
    %cst_8 = arith.constant 0.000000e+00 : f32
    %18 = vector.broadcast %cst_8 : f32 to vector<12x256xf32>
    %19 = arith.subf %18, %17 : vector<12x256xf32>
    %cst_9 = arith.constant dense<0.000000e+00> : vector<256xf32>
    %20 = vector.multi_reduction <add>, %19, %cst_9 [0] : vector<12x256xf32> to vector<256xf32>
    %21 = vector.shape_cast %20 : vector<256xf32> to vector<1x256xf32>
    %cst_10 = arith.constant 1.200000e+01 : f32
    %22 = vector.broadcast %cst_10 : f32 to vector<1x256xf32>
    %23 = arith.divf %21, %22 : vector<1x256xf32>
    %24 = arith.maximumf %13, %23 : vector<1x256xf32>
    %25 = vector.extract_strided_slice %1 {offsets = [24, 0], sizes = [12, 256], strides = [1, 1]} : vector<36x256xf32> to vector<12x256xf32>
    %26 = vector.extract_strided_slice %3 {offsets = [24, 0], sizes = [12, 256], strides = [1, 1]} : vector<36x256xf32> to vector<12x256xf32>
    %27 = arith.subf %25, %26 : vector<12x256xf32>
    %28 = math.absf %27 : vector<12x256xf32>
    %cst_11 = arith.constant 0.000000e+00 : f32
    %29 = vector.broadcast %cst_11 : f32 to vector<12x256xf32>
    %30 = arith.subf %29, %28 : vector<12x256xf32>
    %cst_12 = arith.constant dense<0.000000e+00> : vector<256xf32>
    %31 = vector.multi_reduction <add>, %30, %cst_12 [0] : vector<12x256xf32> to vector<256xf32>
    %32 = vector.shape_cast %31 : vector<256xf32> to vector<1x256xf32>
    %cst_13 = arith.constant 1.200000e+01 : f32
    %33 = vector.broadcast %cst_13 : f32 to vector<1x256xf32>
    %34 = arith.divf %32, %33 : vector<1x256xf32>
    %35 = arith.maximumf %24, %34 : vector<1x256xf32>
    %36 = vector.extract_strided_slice %1 {offsets = [0, 0], sizes = [12, 256], strides = [1, 1]} : vector<36x256xf32> to vector<12x256xf32>
    %37 = vector.extract_strided_slice %3 {offsets = [24, 0], sizes = [12, 256], strides = [1, 1]} : vector<36x256xf32> to vector<12x256xf32>
    %38 = arith.subf %36, %37 : vector<12x256xf32>
    %39 = math.absf %38 : vector<12x256xf32>
    %cst_14 = arith.constant 0.000000e+00 : f32
    %40 = vector.broadcast %cst_14 : f32 to vector<12x256xf32>
    %41 = arith.subf %40, %39 : vector<12x256xf32>
    %cst_15 = arith.constant dense<0.000000e+00> : vector<256xf32>
    %42 = vector.multi_reduction <add>, %41, %cst_15 [0] : vector<12x256xf32> to vector<256xf32>
    %43 = vector.shape_cast %42 : vector<256xf32> to vector<1x256xf32>
    %cst_16 = arith.constant 1.200000e+01 : f32
    %44 = vector.broadcast %cst_16 : f32 to vector<1x256xf32>
    %45 = arith.divf %43, %44 : vector<1x256xf32>
    %46 = arith.maximumf %35, %45 : vector<1x256xf32>
    %47 = vector.extract_strided_slice %1 {offsets = [12, 0], sizes = [12, 256], strides = [1, 1]} : vector<36x256xf32> to vector<12x256xf32>
    %48 = vector.extract_strided_slice %3 {offsets = [0, 0], sizes = [12, 256], strides = [1, 1]} : vector<36x256xf32> to vector<12x256xf32>
    %49 = arith.subf %47, %48 : vector<12x256xf32>
    %50 = math.absf %49 : vector<12x256xf32>
    %cst_17 = arith.constant 0.000000e+00 : f32
    %51 = vector.broadcast %cst_17 : f32 to vector<12x256xf32>
    %52 = arith.subf %51, %50 : vector<12x256xf32>
    %cst_18 = arith.constant dense<0.000000e+00> : vector<256xf32>
    %53 = vector.multi_reduction <add>, %52, %cst_18 [0] : vector<12x256xf32> to vector<256xf32>
    %54 = vector.shape_cast %53 : vector<256xf32> to vector<1x256xf32>
    %cst_19 = arith.constant 1.200000e+01 : f32
    %55 = vector.broadcast %cst_19 : f32 to vector<1x256xf32>
    %56 = arith.divf %54, %55 : vector<1x256xf32>
    %57 = arith.maximumf %46, %56 : vector<1x256xf32>
    %58 = vector.extract_strided_slice %1 {offsets = [24, 0], sizes = [12, 256], strides = [1, 1]} : vector<36x256xf32> to vector<12x256xf32>
    %59 = vector.extract_strided_slice %3 {offsets = [12, 0], sizes = [12, 256], strides = [1, 1]} : vector<36x256xf32> to vector<12x256xf32>
    %60 = arith.subf %58, %59 : vector<12x256xf32>
    %61 = math.absf %60 : vector<12x256xf32>
    %cst_20 = arith.constant 0.000000e+00 : f32
    %62 = vector.broadcast %cst_20 : f32 to vector<12x256xf32>
    %63 = arith.subf %62, %61 : vector<12x256xf32>
    %cst_21 = arith.constant dense<0.000000e+00> : vector<256xf32>
    %64 = vector.multi_reduction <add>, %63, %cst_21 [0] : vector<12x256xf32> to vector<256xf32>
    %65 = vector.shape_cast %64 : vector<256xf32> to vector<1x256xf32>
    %cst_22 = arith.constant 1.200000e+01 : f32
    %66 = vector.broadcast %cst_22 : f32 to vector<1x256xf32>
    %67 = arith.divf %65, %66 : vector<1x256xf32>
    %68 = arith.maximumf %57, %67 : vector<1x256xf32>
    %69 = vector.extract_strided_slice %1 {offsets = [0, 0], sizes = [12, 256], strides = [1, 1]} : vector<36x256xf32> to vector<12x256xf32>
    %70 = vector.extract_strided_slice %3 {offsets = [12, 0], sizes = [12, 256], strides = [1, 1]} : vector<36x256xf32> to vector<12x256xf32>
    %71 = arith.subf %69, %70 : vector<12x256xf32>
    %72 = math.absf %71 : vector<12x256xf32>
    %cst_23 = arith.constant 0.000000e+00 : f32
    %73 = vector.broadcast %cst_23 : f32 to vector<12x256xf32>
    %74 = arith.subf %73, %72 : vector<12x256xf32>
    %cst_24 = arith.constant dense<0.000000e+00> : vector<256xf32>
    %75 = vector.multi_reduction <add>, %74, %cst_24 [0] : vector<12x256xf32> to vector<256xf32>
    %76 = vector.shape_cast %75 : vector<256xf32> to vector<1x256xf32>
    %cst_25 = arith.constant 1.200000e+01 : f32
    %77 = vector.broadcast %cst_25 : f32 to vector<1x256xf32>
    %78 = arith.divf %76, %77 : vector<1x256xf32>
    %79 = arith.maximumf %68, %78 : vector<1x256xf32>
    %80 = vector.extract_strided_slice %1 {offsets = [12, 0], sizes = [12, 256], strides = [1, 1]} : vector<36x256xf32> to vector<12x256xf32>
    %81 = vector.extract_strided_slice %3 {offsets = [24, 0], sizes = [12, 256], strides = [1, 1]} : vector<36x256xf32> to vector<12x256xf32>
    %82 = arith.subf %80, %81 : vector<12x256xf32>
    %83 = math.absf %82 : vector<12x256xf32>
    %cst_26 = arith.constant 0.000000e+00 : f32
    %84 = vector.broadcast %cst_26 : f32 to vector<12x256xf32>
    %85 = arith.subf %84, %83 : vector<12x256xf32>
    %cst_27 = arith.constant dense<0.000000e+00> : vector<256xf32>
    %86 = vector.multi_reduction <add>, %85, %cst_27 [0] : vector<12x256xf32> to vector<256xf32>
    %87 = vector.shape_cast %86 : vector<256xf32> to vector<1x256xf32>
    %cst_28 = arith.constant 1.200000e+01 : f32
    %88 = vector.broadcast %cst_28 : f32 to vector<1x256xf32>
    %89 = arith.divf %87, %88 : vector<1x256xf32>
    %90 = arith.maximumf %79, %89 : vector<1x256xf32>
    %91 = vector.extract_strided_slice %1 {offsets = [24, 0], sizes = [12, 256], strides = [1, 1]} : vector<36x256xf32> to vector<12x256xf32>
    %92 = vector.extract_strided_slice %3 {offsets = [0, 0], sizes = [12, 256], strides = [1, 1]} : vector<36x256xf32> to vector<12x256xf32>
    %93 = arith.subf %91, %92 : vector<12x256xf32>
    %94 = math.absf %93 : vector<12x256xf32>
    %cst_29 = arith.constant 0.000000e+00 : f32
    %95 = vector.broadcast %cst_29 : f32 to vector<12x256xf32>
    %96 = arith.subf %95, %94 : vector<12x256xf32>
    %cst_30 = arith.constant dense<0.000000e+00> : vector<256xf32>
    %97 = vector.multi_reduction <add>, %96, %cst_30 [0] : vector<12x256xf32> to vector<256xf32>
    %98 = vector.shape_cast %97 : vector<256xf32> to vector<1x256xf32>
    %cst_31 = arith.constant 1.200000e+01 : f32
    %99 = vector.broadcast %cst_31 : f32 to vector<1x256xf32>
    %100 = arith.divf %98, %99 : vector<1x256xf32>
    %101 = arith.maximumf %90, %100 : vector<1x256xf32>
    %c0_32 = arith.constant 0 : index
    %c0_33 = arith.constant 0 : index
    %c0_34 = arith.constant 0 : index
    %102 = vector.load %arg4[%c0_32, %c0_33, %c0_34] : memref<1x4x256xf32, #tpu.memory_space<vmem>>, vector<1x1x256xf32>
    %103 = vector.shape_cast %102 : vector<1x1x256xf32> to vector<1x256xf32>
    %c0_35 = arith.constant 0 : index
    %c0_36 = arith.constant 0 : index
    %c0_37 = arith.constant 0 : index
    %104 = vector.load %arg5[%c0_35, %c0_36, %c0_37] : memref<1x4x256xf32, #tpu.memory_space<vmem>>, vector<1x1x256xf32>
    %105 = vector.shape_cast %104 : vector<1x1x256xf32> to vector<1x256xf32>
    %cst_38 = arith.constant 1.000000e+00 : f32
    %106 = vector.broadcast %cst_38 : f32 to vector<1x256xf32>
    %c0_39 = arith.constant 0 : index
    %c1 = arith.constant 1 : index
    %c0_40 = arith.constant 0 : index
    %c0_41 = arith.constant 0 : index
    %107 = vector.load %arg3[%c0_39, %c1, %c0_40, %c0_41] : memref<1x4x36x256xf32, #tpu.memory_space<vmem>>, vector<1x1x36x256xf32>
    %108 = vector.shape_cast %107 : vector<1x1x36x256xf32> to vector<36x256xf32>
    %109 = vector.extract_strided_slice %1 {offsets = [0, 0], sizes = [12, 256], strides = [1, 1]} : vector<36x256xf32> to vector<12x256xf32>
    %110 = vector.extract_strided_slice %108 {offsets = [0, 0], sizes = [12, 256], strides = [1, 1]} : vector<36x256xf32> to vector<12x256xf32>
    %111 = arith.subf %109, %110 : vector<12x256xf32>
    %112 = math.absf %111 : vector<12x256xf32>
    %cst_42 = arith.constant 0.000000e+00 : f32
    %113 = vector.broadcast %cst_42 : f32 to vector<12x256xf32>
    %114 = arith.subf %113, %112 : vector<12x256xf32>
    %cst_43 = arith.constant dense<0.000000e+00> : vector<256xf32>
    %115 = vector.multi_reduction <add>, %114, %cst_43 [0] : vector<12x256xf32> to vector<256xf32>
    %116 = vector.shape_cast %115 : vector<256xf32> to vector<1x256xf32>
    %cst_44 = arith.constant 1.200000e+01 : f32
    %117 = vector.broadcast %cst_44 : f32 to vector<1x256xf32>
    %118 = arith.divf %116, %117 : vector<1x256xf32>
    %119 = vector.extract_strided_slice %1 {offsets = [12, 0], sizes = [12, 256], strides = [1, 1]} : vector<36x256xf32> to vector<12x256xf32>
    %120 = vector.extract_strided_slice %108 {offsets = [12, 0], sizes = [12, 256], strides = [1, 1]} : vector<36x256xf32> to vector<12x256xf32>
    %121 = arith.subf %119, %120 : vector<12x256xf32>
    %122 = math.absf %121 : vector<12x256xf32>
    %cst_45 = arith.constant 0.000000e+00 : f32
    %123 = vector.broadcast %cst_45 : f32 to vector<12x256xf32>
    %124 = arith.subf %123, %122 : vector<12x256xf32>
    %cst_46 = arith.constant dense<0.000000e+00> : vector<256xf32>
    %125 = vector.multi_reduction <add>, %124, %cst_46 [0] : vector<12x256xf32> to vector<256xf32>
    %126 = vector.shape_cast %125 : vector<256xf32> to vector<1x256xf32>
    %cst_47 = arith.constant 1.200000e+01 : f32
    %127 = vector.broadcast %cst_47 : f32 to vector<1x256xf32>
    %128 = arith.divf %126, %127 : vector<1x256xf32>
    %129 = arith.maximumf %118, %128 : vector<1x256xf32>
    %130 = vector.extract_strided_slice %1 {offsets = [24, 0], sizes = [12, 256], strides = [1, 1]} : vector<36x256xf32> to vector<12x256xf32>
    %131 = vector.extract_strided_slice %108 {offsets = [24, 0], sizes = [12, 256], strides = [1, 1]} : vector<36x256xf32> to vector<12x256xf32>
    %132 = arith.subf %130, %131 : vector<12x256xf32>
    %133 = math.absf %132 : vector<12x256xf32>
    %cst_48 = arith.constant 0.000000e+00 : f32
    %134 = vector.broadcast %cst_48 : f32 to vector<12x256xf32>
    %135 = arith.subf %134, %133 : vector<12x256xf32>
    %cst_49 = arith.constant dense<0.000000e+00> : vector<256xf32>
    %136 = vector.multi_reduction <add>, %135, %cst_49 [0] : vector<12x256xf32> to vector<256xf32>
    %137 = vector.shape_cast %136 : vector<256xf32> to vector<1x256xf32>
    %cst_50 = arith.constant 1.200000e+01 : f32
    %138 = vector.broadcast %cst_50 : f32 to vector<1x256xf32>
    %139 = arith.divf %137, %138 : vector<1x256xf32>
    %140 = arith.maximumf %129, %139 : vector<1x256xf32>
    %141 = vector.extract_strided_slice %1 {offsets = [0, 0], sizes = [12, 256], strides = [1, 1]} : vector<36x256xf32> to vector<12x256xf32>
    %142 = vector.extract_strided_slice %108 {offsets = [24, 0], sizes = [12, 256], strides = [1, 1]} : vector<36x256xf32> to vector<12x256xf32>
    %143 = arith.subf %141, %142 : vector<12x256xf32>
    %144 = math.absf %143 : vector<12x256xf32>
    %cst_51 = arith.constant 0.000000e+00 : f32
    %145 = vector.broadcast %cst_51 : f32 to vector<12x256xf32>
    %146 = arith.subf %145, %144 : vector<12x256xf32>
    %cst_52 = arith.constant dense<0.000000e+00> : vector<256xf32>
    %147 = vector.multi_reduction <add>, %146, %cst_52 [0] : vector<12x256xf32> to vector<256xf32>
    %148 = vector.shape_cast %147 : vector<256xf32> to vector<1x256xf32>
    %cst_53 = arith.constant 1.200000e+01 : f32
    %149 = vector.broadcast %cst_53 : f32 to vector<1x256xf32>
    %150 = arith.divf %148, %149 : vector<1x256xf32>
    %151 = arith.maximumf %140, %150 : vector<1x256xf32>
    %152 = vector.extract_strided_slice %1 {offsets = [12, 0], sizes = [12, 256], strides = [1, 1]} : vector<36x256xf32> to vector<12x256xf32>
    %153 = vector.extract_strided_slice %108 {offsets = [0, 0], sizes = [12, 256], strides = [1, 1]} : vector<36x256xf32> to vector<12x256xf32>
    %154 = arith.subf %152, %153 : vector<12x256xf32>
    %155 = math.absf %154 : vector<12x256xf32>
    %cst_54 = arith.constant 0.000000e+00 : f32
    %156 = vector.broadcast %cst_54 : f32 to vector<12x256xf32>
    %157 = arith.subf %156, %155 : vector<12x256xf32>
    %cst_55 = arith.constant dense<0.000000e+00> : vector<256xf32>
    %158 = vector.multi_reduction <add>, %157, %cst_55 [0] : vector<12x256xf32> to vector<256xf32>
    %159 = vector.shape_cast %158 : vector<256xf32> to vector<1x256xf32>
    %cst_56 = arith.constant 1.200000e+01 : f32
    %160 = vector.broadcast %cst_56 : f32 to vector<1x256xf32>
    %161 = arith.divf %159, %160 : vector<1x256xf32>
    %162 = arith.maximumf %151, %161 : vector<1x256xf32>
    %163 = vector.extract_strided_slice %1 {offsets = [24, 0], sizes = [12, 256], strides = [1, 1]} : vector<36x256xf32> to vector<12x256xf32>
    %164 = vector.extract_strided_slice %108 {offsets = [12, 0], sizes = [12, 256], strides = [1, 1]} : vector<36x256xf32> to vector<12x256xf32>
    %165 = arith.subf %163, %164 : vector<12x256xf32>
    %166 = math.absf %165 : vector<12x256xf32>
    %cst_57 = arith.constant 0.000000e+00 : f32
    %167 = vector.broadcast %cst_57 : f32 to vector<12x256xf32>
    %168 = arith.subf %167, %166 : vector<12x256xf32>
    %cst_58 = arith.constant dense<0.000000e+00> : vector<256xf32>
    %169 = vector.multi_reduction <add>, %168, %cst_58 [0] : vector<12x256xf32> to vector<256xf32>
    %170 = vector.shape_cast %169 : vector<256xf32> to vector<1x256xf32>
    %cst_59 = arith.constant 1.200000e+01 : f32
    %171 = vector.broadcast %cst_59 : f32 to vector<1x256xf32>
    %172 = arith.divf %170, %171 : vector<1x256xf32>
    %173 = arith.maximumf %162, %172 : vector<1x256xf32>
    %174 = vector.extract_strided_slice %1 {offsets = [0, 0], sizes = [12, 256], strides = [1, 1]} : vector<36x256xf32> to vector<12x256xf32>
    %175 = vector.extract_strided_slice %108 {offsets = [12, 0], sizes = [12, 256], strides = [1, 1]} : vector<36x256xf32> to vector<12x256xf32>
    %176 = arith.subf %174, %175 : vector<12x256xf32>
    %177 = math.absf %176 : vector<12x256xf32>
    %cst_60 = arith.constant 0.000000e+00 : f32
    %178 = vector.broadcast %cst_60 : f32 to vector<12x256xf32>
    %179 = arith.subf %178, %177 : vector<12x256xf32>
    %cst_61 = arith.constant dense<0.000000e+00> : vector<256xf32>
    %180 = vector.multi_reduction <add>, %179, %cst_61 [0] : vector<12x256xf32> to vector<256xf32>
    %181 = vector.shape_cast %180 : vector<256xf32> to vector<1x256xf32>
    %cst_62 = arith.constant 1.200000e+01 : f32
    %182 = vector.broadcast %cst_62 : f32 to vector<1x256xf32>
    %183 = arith.divf %181, %182 : vector<1x256xf32>
    %184 = arith.maximumf %173, %183 : vector<1x256xf32>
    %185 = vector.extract_strided_slice %1 {offsets = [12, 0], sizes = [12, 256], strides = [1, 1]} : vector<36x256xf32> to vector<12x256xf32>
    %186 = vector.extract_strided_slice %108 {offsets = [24, 0], sizes = [12, 256], strides = [1, 1]} : vector<36x256xf32> to vector<12x256xf32>
    %187 = arith.subf %185, %186 : vector<12x256xf32>
    %188 = math.absf %187 : vector<12x256xf32>
    %cst_63 = arith.constant 0.000000e+00 : f32
    %189 = vector.broadcast %cst_63 : f32 to vector<12x256xf32>
    %190 = arith.subf %189, %188 : vector<12x256xf32>
    %cst_64 = arith.constant dense<0.000000e+00> : vector<256xf32>
    %191 = vector.multi_reduction <add>, %190, %cst_64 [0] : vector<12x256xf32> to vector<256xf32>
    %192 = vector.shape_cast %191 : vector<256xf32> to vector<1x256xf32>
    %cst_65 = arith.constant 1.200000e+01 : f32
    %193 = vector.broadcast %cst_65 : f32 to vector<1x256xf32>
    %194 = arith.divf %192, %193 : vector<1x256xf32>
    %195 = arith.maximumf %184, %194 : vector<1x256xf32>
    %196 = vector.extract_strided_slice %1 {offsets = [24, 0], sizes = [12, 256], strides = [1, 1]} : vector<36x256xf32> to vector<12x256xf32>
    %197 = vector.extract_strided_slice %108 {offsets = [0, 0], sizes = [12, 256], strides = [1, 1]} : vector<36x256xf32> to vector<12x256xf32>
    %198 = arith.subf %196, %197 : vector<12x256xf32>
    %199 = math.absf %198 : vector<12x256xf32>
    %cst_66 = arith.constant 0.000000e+00 : f32
    %200 = vector.broadcast %cst_66 : f32 to vector<12x256xf32>
    %201 = arith.subf %200, %199 : vector<12x256xf32>
    %cst_67 = arith.constant dense<0.000000e+00> : vector<256xf32>
    %202 = vector.multi_reduction <add>, %201, %cst_67 [0] : vector<12x256xf32> to vector<256xf32>
    %203 = vector.shape_cast %202 : vector<256xf32> to vector<1x256xf32>
    %cst_68 = arith.constant 1.200000e+01 : f32
    %204 = vector.broadcast %cst_68 : f32 to vector<1x256xf32>
    %205 = arith.divf %203, %204 : vector<1x256xf32>
    %206 = arith.maximumf %195, %205 : vector<1x256xf32>
    %c0_69 = arith.constant 0 : index
    %c1_70 = arith.constant 1 : index
    %c0_71 = arith.constant 0 : index
    %207 = vector.load %arg4[%c0_69, %c1_70, %c0_71] : memref<1x4x256xf32, #tpu.memory_space<vmem>>, vector<1x1x256xf32>
    %208 = vector.shape_cast %207 : vector<1x1x256xf32> to vector<1x256xf32>
    %c0_72 = arith.constant 0 : index
    %c1_73 = arith.constant 1 : index
    %c0_74 = arith.constant 0 : index
    %209 = vector.load %arg5[%c0_72, %c1_73, %c0_74] : memref<1x4x256xf32, #tpu.memory_space<vmem>>, vector<1x1x256xf32>
    %210 = vector.shape_cast %209 : vector<1x1x256xf32> to vector<1x256xf32>
    %211 = arith.maximumf %101, %206 : vector<1x256xf32>
    %212 = arith.subf %101, %211 : vector<1x256xf32>
    %cst_75 = arith.constant 1.000000e+03 : f32
    %213 = vector.broadcast %cst_75 : f32 to vector<1x256xf32>
    %214 = arith.mulf %212, %213 : vector<1x256xf32>
    %215 = math.exp %214 : vector<1x256xf32>
    %216 = arith.subf %206, %211 : vector<1x256xf32>
    %cst_76 = arith.constant 1.000000e+03 : f32
    %217 = vector.broadcast %cst_76 : f32 to vector<1x256xf32>
    %218 = arith.mulf %216, %217 : vector<1x256xf32>
    %219 = math.exp %218 : vector<1x256xf32>
    %220 = arith.mulf %106, %215 : vector<1x256xf32>
    %221 = arith.addf %220, %219 : vector<1x256xf32>
    %222 = arith.mulf %103, %215 : vector<1x256xf32>
    %223 = arith.mulf %208, %219 : vector<1x256xf32>
    %224 = arith.addf %222, %223 : vector<1x256xf32>
    %225 = arith.mulf %105, %215 : vector<1x256xf32>
    %226 = arith.mulf %210, %219 : vector<1x256xf32>
    %227 = arith.addf %225, %226 : vector<1x256xf32>
    %c0_77 = arith.constant 0 : index
    %c2 = arith.constant 2 : index
    %c0_78 = arith.constant 0 : index
    %c0_79 = arith.constant 0 : index
    %228 = vector.load %arg3[%c0_77, %c2, %c0_78, %c0_79] : memref<1x4x36x256xf32, #tpu.memory_space<vmem>>, vector<1x1x36x256xf32>
    %229 = vector.shape_cast %228 : vector<1x1x36x256xf32> to vector<36x256xf32>
    %230 = vector.extract_strided_slice %1 {offsets = [0, 0], sizes = [12, 256], strides = [1, 1]} : vector<36x256xf32> to vector<12x256xf32>
    %231 = vector.extract_strided_slice %229 {offsets = [0, 0], sizes = [12, 256], strides = [1, 1]} : vector<36x256xf32> to vector<12x256xf32>
    %232 = arith.subf %230, %231 : vector<12x256xf32>
    %233 = math.absf %232 : vector<12x256xf32>
    %cst_80 = arith.constant 0.000000e+00 : f32
    %234 = vector.broadcast %cst_80 : f32 to vector<12x256xf32>
    %235 = arith.subf %234, %233 : vector<12x256xf32>
    %cst_81 = arith.constant dense<0.000000e+00> : vector<256xf32>
    %236 = vector.multi_reduction <add>, %235, %cst_81 [0] : vector<12x256xf32> to vector<256xf32>
    %237 = vector.shape_cast %236 : vector<256xf32> to vector<1x256xf32>
    %cst_82 = arith.constant 1.200000e+01 : f32
    %238 = vector.broadcast %cst_82 : f32 to vector<1x256xf32>
    %239 = arith.divf %237, %238 : vector<1x256xf32>
    %240 = vector.extract_strided_slice %1 {offsets = [12, 0], sizes = [12, 256], strides = [1, 1]} : vector<36x256xf32> to vector<12x256xf32>
    %241 = vector.extract_strided_slice %229 {offsets = [12, 0], sizes = [12, 256], strides = [1, 1]} : vector<36x256xf32> to vector<12x256xf32>
    %242 = arith.subf %240, %241 : vector<12x256xf32>
    %243 = math.absf %242 : vector<12x256xf32>
    %cst_83 = arith.constant 0.000000e+00 : f32
    %244 = vector.broadcast %cst_83 : f32 to vector<12x256xf32>
    %245 = arith.subf %244, %243 : vector<12x256xf32>
    %cst_84 = arith.constant dense<0.000000e+00> : vector<256xf32>
    %246 = vector.multi_reduction <add>, %245, %cst_84 [0] : vector<12x256xf32> to vector<256xf32>
    %247 = vector.shape_cast %246 : vector<256xf32> to vector<1x256xf32>
    %cst_85 = arith.constant 1.200000e+01 : f32
    %248 = vector.broadcast %cst_85 : f32 to vector<1x256xf32>
    %249 = arith.divf %247, %248 : vector<1x256xf32>
    %250 = arith.maximumf %239, %249 : vector<1x256xf32>
    %251 = vector.extract_strided_slice %1 {offsets = [24, 0], sizes = [12, 256], strides = [1, 1]} : vector<36x256xf32> to vector<12x256xf32>
    %252 = vector.extract_strided_slice %229 {offsets = [24, 0], sizes = [12, 256], strides = [1, 1]} : vector<36x256xf32> to vector<12x256xf32>
    %253 = arith.subf %251, %252 : vector<12x256xf32>
    %254 = math.absf %253 : vector<12x256xf32>
    %cst_86 = arith.constant 0.000000e+00 : f32
    %255 = vector.broadcast %cst_86 : f32 to vector<12x256xf32>
    %256 = arith.subf %255, %254 : vector<12x256xf32>
    %cst_87 = arith.constant dense<0.000000e+00> : vector<256xf32>
    %257 = vector.multi_reduction <add>, %256, %cst_87 [0] : vector<12x256xf32> to vector<256xf32>
    %258 = vector.shape_cast %257 : vector<256xf32> to vector<1x256xf32>
    %cst_88 = arith.constant 1.200000e+01 : f32
    %259 = vector.broadcast %cst_88 : f32 to vector<1x256xf32>
    %260 = arith.divf %258, %259 : vector<1x256xf32>
    %261 = arith.maximumf %250, %260 : vector<1x256xf32>
    %262 = vector.extract_strided_slice %1 {offsets = [0, 0], sizes = [12, 256], strides = [1, 1]} : vector<36x256xf32> to vector<12x256xf32>
    %263 = vector.extract_strided_slice %229 {offsets = [24, 0], sizes = [12, 256], strides = [1, 1]} : vector<36x256xf32> to vector<12x256xf32>
    %264 = arith.subf %262, %263 : vector<12x256xf32>
    %265 = math.absf %264 : vector<12x256xf32>
    %cst_89 = arith.constant 0.000000e+00 : f32
    %266 = vector.broadcast %cst_89 : f32 to vector<12x256xf32>
    %267 = arith.subf %266, %265 : vector<12x256xf32>
    %cst_90 = arith.constant dense<0.000000e+00> : vector<256xf32>
    %268 = vector.multi_reduction <add>, %267, %cst_90 [0] : vector<12x256xf32> to vector<256xf32>
    %269 = vector.shape_cast %268 : vector<256xf32> to vector<1x256xf32>
    %cst_91 = arith.constant 1.200000e+01 : f32
    %270 = vector.broadcast %cst_91 : f32 to vector<1x256xf32>
    %271 = arith.divf %269, %270 : vector<1x256xf32>
    %272 = arith.maximumf %261, %271 : vector<1x256xf32>
    %273 = vector.extract_strided_slice %1 {offsets = [12, 0], sizes = [12, 256], strides = [1, 1]} : vector<36x256xf32> to vector<12x256xf32>
    %274 = vector.extract_strided_slice %229 {offsets = [0, 0], sizes = [12, 256], strides = [1, 1]} : vector<36x256xf32> to vector<12x256xf32>
    %275 = arith.subf %273, %274 : vector<12x256xf32>
    %276 = math.absf %275 : vector<12x256xf32>
    %cst_92 = arith.constant 0.000000e+00 : f32
    %277 = vector.broadcast %cst_92 : f32 to vector<12x256xf32>
    %278 = arith.subf %277, %276 : vector<12x256xf32>
    %cst_93 = arith.constant dense<0.000000e+00> : vector<256xf32>
    %279 = vector.multi_reduction <add>, %278, %cst_93 [0] : vector<12x256xf32> to vector<256xf32>
    %280 = vector.shape_cast %279 : vector<256xf32> to vector<1x256xf32>
    %cst_94 = arith.constant 1.200000e+01 : f32
    %281 = vector.broadcast %cst_94 : f32 to vector<1x256xf32>
    %282 = arith.divf %280, %281 : vector<1x256xf32>
    %283 = arith.maximumf %272, %282 : vector<1x256xf32>
    %284 = vector.extract_strided_slice %1 {offsets = [24, 0], sizes = [12, 256], strides = [1, 1]} : vector<36x256xf32> to vector<12x256xf32>
    %285 = vector.extract_strided_slice %229 {offsets = [12, 0], sizes = [12, 256], strides = [1, 1]} : vector<36x256xf32> to vector<12x256xf32>
    %286 = arith.subf %284, %285 : vector<12x256xf32>
    %287 = math.absf %286 : vector<12x256xf32>
    %cst_95 = arith.constant 0.000000e+00 : f32
    %288 = vector.broadcast %cst_95 : f32 to vector<12x256xf32>
    %289 = arith.subf %288, %287 : vector<12x256xf32>
    %cst_96 = arith.constant dense<0.000000e+00> : vector<256xf32>
    %290 = vector.multi_reduction <add>, %289, %cst_96 [0] : vector<12x256xf32> to vector<256xf32>
    %291 = vector.shape_cast %290 : vector<256xf32> to vector<1x256xf32>
    %cst_97 = arith.constant 1.200000e+01 : f32
    %292 = vector.broadcast %cst_97 : f32 to vector<1x256xf32>
    %293 = arith.divf %291, %292 : vector<1x256xf32>
    %294 = arith.maximumf %283, %293 : vector<1x256xf32>
    %295 = vector.extract_strided_slice %1 {offsets = [0, 0], sizes = [12, 256], strides = [1, 1]} : vector<36x256xf32> to vector<12x256xf32>
    %296 = vector.extract_strided_slice %229 {offsets = [12, 0], sizes = [12, 256], strides = [1, 1]} : vector<36x256xf32> to vector<12x256xf32>
    %297 = arith.subf %295, %296 : vector<12x256xf32>
    %298 = math.absf %297 : vector<12x256xf32>
    %cst_98 = arith.constant 0.000000e+00 : f32
    %299 = vector.broadcast %cst_98 : f32 to vector<12x256xf32>
    %300 = arith.subf %299, %298 : vector<12x256xf32>
    %cst_99 = arith.constant dense<0.000000e+00> : vector<256xf32>
    %301 = vector.multi_reduction <add>, %300, %cst_99 [0] : vector<12x256xf32> to vector<256xf32>
    %302 = vector.shape_cast %301 : vector<256xf32> to vector<1x256xf32>
    %cst_100 = arith.constant 1.200000e+01 : f32
    %303 = vector.broadcast %cst_100 : f32 to vector<1x256xf32>
    %304 = arith.divf %302, %303 : vector<1x256xf32>
    %305 = arith.maximumf %294, %304 : vector<1x256xf32>
    %306 = vector.extract_strided_slice %1 {offsets = [12, 0], sizes = [12, 256], strides = [1, 1]} : vector<36x256xf32> to vector<12x256xf32>
    %307 = vector.extract_strided_slice %229 {offsets = [24, 0], sizes = [12, 256], strides = [1, 1]} : vector<36x256xf32> to vector<12x256xf32>
    %308 = arith.subf %306, %307 : vector<12x256xf32>
    %309 = math.absf %308 : vector<12x256xf32>
    %cst_101 = arith.constant 0.000000e+00 : f32
    %310 = vector.broadcast %cst_101 : f32 to vector<12x256xf32>
    %311 = arith.subf %310, %309 : vector<12x256xf32>
    %cst_102 = arith.constant dense<0.000000e+00> : vector<256xf32>
    %312 = vector.multi_reduction <add>, %311, %cst_102 [0] : vector<12x256xf32> to vector<256xf32>
    %313 = vector.shape_cast %312 : vector<256xf32> to vector<1x256xf32>
    %cst_103 = arith.constant 1.200000e+01 : f32
    %314 = vector.broadcast %cst_103 : f32 to vector<1x256xf32>
    %315 = arith.divf %313, %314 : vector<1x256xf32>
    %316 = arith.maximumf %305, %315 : vector<1x256xf32>
    %317 = vector.extract_strided_slice %1 {offsets = [24, 0], sizes = [12, 256], strides = [1, 1]} : vector<36x256xf32> to vector<12x256xf32>
    %318 = vector.extract_strided_slice %229 {offsets = [0, 0], sizes = [12, 256], strides = [1, 1]} : vector<36x256xf32> to vector<12x256xf32>
    %319 = arith.subf %317, %318 : vector<12x256xf32>
    %320 = math.absf %319 : vector<12x256xf32>
    %cst_104 = arith.constant 0.000000e+00 : f32
    %321 = vector.broadcast %cst_104 : f32 to vector<12x256xf32>
    %322 = arith.subf %321, %320 : vector<12x256xf32>
    %cst_105 = arith.constant dense<0.000000e+00> : vector<256xf32>
    %323 = vector.multi_reduction <add>, %322, %cst_105 [0] : vector<12x256xf32> to vector<256xf32>
    %324 = vector.shape_cast %323 : vector<256xf32> to vector<1x256xf32>
    %cst_106 = arith.constant 1.200000e+01 : f32
    %325 = vector.broadcast %cst_106 : f32 to vector<1x256xf32>
    %326 = arith.divf %324, %325 : vector<1x256xf32>
    %327 = arith.maximumf %316, %326 : vector<1x256xf32>
    %c0_107 = arith.constant 0 : index
    %c2_108 = arith.constant 2 : index
    %c0_109 = arith.constant 0 : index
    %328 = vector.load %arg4[%c0_107, %c2_108, %c0_109] : memref<1x4x256xf32, #tpu.memory_space<vmem>>, vector<1x1x256xf32>
    %329 = vector.shape_cast %328 : vector<1x1x256xf32> to vector<1x256xf32>
    %c0_110 = arith.constant 0 : index
    %c2_111 = arith.constant 2 : index
    %c0_112 = arith.constant 0 : index
    %330 = vector.load %arg5[%c0_110, %c2_111, %c0_112] : memref<1x4x256xf32, #tpu.memory_space<vmem>>, vector<1x1x256xf32>
    %331 = vector.shape_cast %330 : vector<1x1x256xf32> to vector<1x256xf32>
    %332 = arith.maximumf %211, %327 : vector<1x256xf32>
    %333 = arith.subf %211, %332 : vector<1x256xf32>
    %cst_113 = arith.constant 1.000000e+03 : f32
    %334 = vector.broadcast %cst_113 : f32 to vector<1x256xf32>
    %335 = arith.mulf %333, %334 : vector<1x256xf32>
    %336 = math.exp %335 : vector<1x256xf32>
    %337 = arith.subf %327, %332 : vector<1x256xf32>
    %cst_114 = arith.constant 1.000000e+03 : f32
    %338 = vector.broadcast %cst_114 : f32 to vector<1x256xf32>
    %339 = arith.mulf %337, %338 : vector<1x256xf32>
    %340 = math.exp %339 : vector<1x256xf32>
    %341 = arith.mulf %221, %336 : vector<1x256xf32>
    %342 = arith.addf %341, %340 : vector<1x256xf32>
    %343 = arith.mulf %224, %336 : vector<1x256xf32>
    %344 = arith.mulf %329, %340 : vector<1x256xf32>
    %345 = arith.addf %343, %344 : vector<1x256xf32>
    %346 = arith.mulf %227, %336 : vector<1x256xf32>
    %347 = arith.mulf %331, %340 : vector<1x256xf32>
    %348 = arith.addf %346, %347 : vector<1x256xf32>
    %c0_115 = arith.constant 0 : index
    %c3 = arith.constant 3 : index
    %c0_116 = arith.constant 0 : index
    %c0_117 = arith.constant 0 : index
    %349 = vector.load %arg3[%c0_115, %c3, %c0_116, %c0_117] : memref<1x4x36x256xf32, #tpu.memory_space<vmem>>, vector<1x1x36x256xf32>
    %350 = vector.shape_cast %349 : vector<1x1x36x256xf32> to vector<36x256xf32>
    %351 = vector.extract_strided_slice %1 {offsets = [0, 0], sizes = [12, 256], strides = [1, 1]} : vector<36x256xf32> to vector<12x256xf32>
    %352 = vector.extract_strided_slice %350 {offsets = [0, 0], sizes = [12, 256], strides = [1, 1]} : vector<36x256xf32> to vector<12x256xf32>
    %353 = arith.subf %351, %352 : vector<12x256xf32>
    %354 = math.absf %353 : vector<12x256xf32>
    %cst_118 = arith.constant 0.000000e+00 : f32
    %355 = vector.broadcast %cst_118 : f32 to vector<12x256xf32>
    %356 = arith.subf %355, %354 : vector<12x256xf32>
    %cst_119 = arith.constant dense<0.000000e+00> : vector<256xf32>
    %357 = vector.multi_reduction <add>, %356, %cst_119 [0] : vector<12x256xf32> to vector<256xf32>
    %358 = vector.shape_cast %357 : vector<256xf32> to vector<1x256xf32>
    %cst_120 = arith.constant 1.200000e+01 : f32
    %359 = vector.broadcast %cst_120 : f32 to vector<1x256xf32>
    %360 = arith.divf %358, %359 : vector<1x256xf32>
    %361 = vector.extract_strided_slice %1 {offsets = [12, 0], sizes = [12, 256], strides = [1, 1]} : vector<36x256xf32> to vector<12x256xf32>
    %362 = vector.extract_strided_slice %350 {offsets = [12, 0], sizes = [12, 256], strides = [1, 1]} : vector<36x256xf32> to vector<12x256xf32>
    %363 = arith.subf %361, %362 : vector<12x256xf32>
    %364 = math.absf %363 : vector<12x256xf32>
    %cst_121 = arith.constant 0.000000e+00 : f32
    %365 = vector.broadcast %cst_121 : f32 to vector<12x256xf32>
    %366 = arith.subf %365, %364 : vector<12x256xf32>
    %cst_122 = arith.constant dense<0.000000e+00> : vector<256xf32>
    %367 = vector.multi_reduction <add>, %366, %cst_122 [0] : vector<12x256xf32> to vector<256xf32>
    %368 = vector.shape_cast %367 : vector<256xf32> to vector<1x256xf32>
    %cst_123 = arith.constant 1.200000e+01 : f32
    %369 = vector.broadcast %cst_123 : f32 to vector<1x256xf32>
    %370 = arith.divf %368, %369 : vector<1x256xf32>
    %371 = arith.maximumf %360, %370 : vector<1x256xf32>
    %372 = vector.extract_strided_slice %1 {offsets = [24, 0], sizes = [12, 256], strides = [1, 1]} : vector<36x256xf32> to vector<12x256xf32>
    %373 = vector.extract_strided_slice %350 {offsets = [24, 0], sizes = [12, 256], strides = [1, 1]} : vector<36x256xf32> to vector<12x256xf32>
    %374 = arith.subf %372, %373 : vector<12x256xf32>
    %375 = math.absf %374 : vector<12x256xf32>
    %cst_124 = arith.constant 0.000000e+00 : f32
    %376 = vector.broadcast %cst_124 : f32 to vector<12x256xf32>
    %377 = arith.subf %376, %375 : vector<12x256xf32>
    %cst_125 = arith.constant dense<0.000000e+00> : vector<256xf32>
    %378 = vector.multi_reduction <add>, %377, %cst_125 [0] : vector<12x256xf32> to vector<256xf32>
    %379 = vector.shape_cast %378 : vector<256xf32> to vector<1x256xf32>
    %cst_126 = arith.constant 1.200000e+01 : f32
    %380 = vector.broadcast %cst_126 : f32 to vector<1x256xf32>
    %381 = arith.divf %379, %380 : vector<1x256xf32>
    %382 = arith.maximumf %371, %381 : vector<1x256xf32>
    %383 = vector.extract_strided_slice %1 {offsets = [0, 0], sizes = [12, 256], strides = [1, 1]} : vector<36x256xf32> to vector<12x256xf32>
    %384 = vector.extract_strided_slice %350 {offsets = [24, 0], sizes = [12, 256], strides = [1, 1]} : vector<36x256xf32> to vector<12x256xf32>
    %385 = arith.subf %383, %384 : vector<12x256xf32>
    %386 = math.absf %385 : vector<12x256xf32>
    %cst_127 = arith.constant 0.000000e+00 : f32
    %387 = vector.broadcast %cst_127 : f32 to vector<12x256xf32>
    %388 = arith.subf %387, %386 : vector<12x256xf32>
    %cst_128 = arith.constant dense<0.000000e+00> : vector<256xf32>
    %389 = vector.multi_reduction <add>, %388, %cst_128 [0] : vector<12x256xf32> to vector<256xf32>
    %390 = vector.shape_cast %389 : vector<256xf32> to vector<1x256xf32>
    %cst_129 = arith.constant 1.200000e+01 : f32
    %391 = vector.broadcast %cst_129 : f32 to vector<1x256xf32>
    %392 = arith.divf %390, %391 : vector<1x256xf32>
    %393 = arith.maximumf %382, %392 : vector<1x256xf32>
    %394 = vector.extract_strided_slice %1 {offsets = [12, 0], sizes = [12, 256], strides = [1, 1]} : vector<36x256xf32> to vector<12x256xf32>
    %395 = vector.extract_strided_slice %350 {offsets = [0, 0], sizes = [12, 256], strides = [1, 1]} : vector<36x256xf32> to vector<12x256xf32>
    %396 = arith.subf %394, %395 : vector<12x256xf32>
    %397 = math.absf %396 : vector<12x256xf32>
    %cst_130 = arith.constant 0.000000e+00 : f32
    %398 = vector.broadcast %cst_130 : f32 to vector<12x256xf32>
    %399 = arith.subf %398, %397 : vector<12x256xf32>
    %cst_131 = arith.constant dense<0.000000e+00> : vector<256xf32>
    %400 = vector.multi_reduction <add>, %399, %cst_131 [0] : vector<12x256xf32> to vector<256xf32>
    %401 = vector.shape_cast %400 : vector<256xf32> to vector<1x256xf32>
    %cst_132 = arith.constant 1.200000e+01 : f32
    %402 = vector.broadcast %cst_132 : f32 to vector<1x256xf32>
    %403 = arith.divf %401, %402 : vector<1x256xf32>
    %404 = arith.maximumf %393, %403 : vector<1x256xf32>
    %405 = vector.extract_strided_slice %1 {offsets = [24, 0], sizes = [12, 256], strides = [1, 1]} : vector<36x256xf32> to vector<12x256xf32>
    %406 = vector.extract_strided_slice %350 {offsets = [12, 0], sizes = [12, 256], strides = [1, 1]} : vector<36x256xf32> to vector<12x256xf32>
    %407 = arith.subf %405, %406 : vector<12x256xf32>
    %408 = math.absf %407 : vector<12x256xf32>
    %cst_133 = arith.constant 0.000000e+00 : f32
    %409 = vector.broadcast %cst_133 : f32 to vector<12x256xf32>
    %410 = arith.subf %409, %408 : vector<12x256xf32>
    %cst_134 = arith.constant dense<0.000000e+00> : vector<256xf32>
    %411 = vector.multi_reduction <add>, %410, %cst_134 [0] : vector<12x256xf32> to vector<256xf32>
    %412 = vector.shape_cast %411 : vector<256xf32> to vector<1x256xf32>
    %cst_135 = arith.constant 1.200000e+01 : f32
    %413 = vector.broadcast %cst_135 : f32 to vector<1x256xf32>
    %414 = arith.divf %412, %413 : vector<1x256xf32>
    %415 = arith.maximumf %404, %414 : vector<1x256xf32>
    %416 = vector.extract_strided_slice %1 {offsets = [0, 0], sizes = [12, 256], strides = [1, 1]} : vector<36x256xf32> to vector<12x256xf32>
    %417 = vector.extract_strided_slice %350 {offsets = [12, 0], sizes = [12, 256], strides = [1, 1]} : vector<36x256xf32> to vector<12x256xf32>
    %418 = arith.subf %416, %417 : vector<12x256xf32>
    %419 = math.absf %418 : vector<12x256xf32>
    %cst_136 = arith.constant 0.000000e+00 : f32
    %420 = vector.broadcast %cst_136 : f32 to vector<12x256xf32>
    %421 = arith.subf %420, %419 : vector<12x256xf32>
    %cst_137 = arith.constant dense<0.000000e+00> : vector<256xf32>
    %422 = vector.multi_reduction <add>, %421, %cst_137 [0] : vector<12x256xf32> to vector<256xf32>
    %423 = vector.shape_cast %422 : vector<256xf32> to vector<1x256xf32>
    %cst_138 = arith.constant 1.200000e+01 : f32
    %424 = vector.broadcast %cst_138 : f32 to vector<1x256xf32>
    %425 = arith.divf %423, %424 : vector<1x256xf32>
    %426 = arith.maximumf %415, %425 : vector<1x256xf32>
    %427 = vector.extract_strided_slice %1 {offsets = [12, 0], sizes = [12, 256], strides = [1, 1]} : vector<36x256xf32> to vector<12x256xf32>
    %428 = vector.extract_strided_slice %350 {offsets = [24, 0], sizes = [12, 256], strides = [1, 1]} : vector<36x256xf32> to vector<12x256xf32>
    %429 = arith.subf %427, %428 : vector<12x256xf32>
    %430 = math.absf %429 : vector<12x256xf32>
    %cst_139 = arith.constant 0.000000e+00 : f32
    %431 = vector.broadcast %cst_139 : f32 to vector<12x256xf32>
    %432 = arith.subf %431, %430 : vector<12x256xf32>
    %cst_140 = arith.constant dense<0.000000e+00> : vector<256xf32>
    %433 = vector.multi_reduction <add>, %432, %cst_140 [0] : vector<12x256xf32> to vector<256xf32>
    %434 = vector.shape_cast %433 : vector<256xf32> to vector<1x256xf32>
    %cst_141 = arith.constant 1.200000e+01 : f32
    %435 = vector.broadcast %cst_141 : f32 to vector<1x256xf32>
    %436 = arith.divf %434, %435 : vector<1x256xf32>
    %437 = arith.maximumf %426, %436 : vector<1x256xf32>
    %438 = vector.extract_strided_slice %1 {offsets = [24, 0], sizes = [12, 256], strides = [1, 1]} : vector<36x256xf32> to vector<12x256xf32>
    %439 = vector.extract_strided_slice %350 {offsets = [0, 0], sizes = [12, 256], strides = [1, 1]} : vector<36x256xf32> to vector<12x256xf32>
    %440 = arith.subf %438, %439 : vector<12x256xf32>
    %441 = math.absf %440 : vector<12x256xf32>
    %cst_142 = arith.constant 0.000000e+00 : f32
    %442 = vector.broadcast %cst_142 : f32 to vector<12x256xf32>
    %443 = arith.subf %442, %441 : vector<12x256xf32>
    %cst_143 = arith.constant dense<0.000000e+00> : vector<256xf32>
    %444 = vector.multi_reduction <add>, %443, %cst_143 [0] : vector<12x256xf32> to vector<256xf32>
    %445 = vector.shape_cast %444 : vector<256xf32> to vector<1x256xf32>
    %cst_144 = arith.constant 1.200000e+01 : f32
    %446 = vector.broadcast %cst_144 : f32 to vector<1x256xf32>
    %447 = arith.divf %445, %446 : vector<1x256xf32>
    %448 = arith.maximumf %437, %447 : vector<1x256xf32>
    %c0_145 = arith.constant 0 : index
    %c3_146 = arith.constant 3 : index
    %c0_147 = arith.constant 0 : index
    %449 = vector.load %arg4[%c0_145, %c3_146, %c0_147] : memref<1x4x256xf32, #tpu.memory_space<vmem>>, vector<1x1x256xf32>
    %450 = vector.shape_cast %449 : vector<1x1x256xf32> to vector<1x256xf32>
    %c0_148 = arith.constant 0 : index
    %c3_149 = arith.constant 3 : index
    %c0_150 = arith.constant 0 : index
    %451 = vector.load %arg5[%c0_148, %c3_149, %c0_150] : memref<1x4x256xf32, #tpu.memory_space<vmem>>, vector<1x1x256xf32>
    %452 = vector.shape_cast %451 : vector<1x1x256xf32> to vector<1x256xf32>
    %453 = arith.maximumf %332, %448 : vector<1x256xf32>
    %454 = arith.subf %332, %453 : vector<1x256xf32>
    %cst_151 = arith.constant 1.000000e+03 : f32
    %455 = vector.broadcast %cst_151 : f32 to vector<1x256xf32>
    %456 = arith.mulf %454, %455 : vector<1x256xf32>
    %457 = math.exp %456 : vector<1x256xf32>
    %458 = arith.subf %448, %453 : vector<1x256xf32>
    %cst_152 = arith.constant 1.000000e+03 : f32
    %459 = vector.broadcast %cst_152 : f32 to vector<1x256xf32>
    %460 = arith.mulf %458, %459 : vector<1x256xf32>
    %461 = math.exp %460 : vector<1x256xf32>
    %462 = arith.mulf %342, %457 : vector<1x256xf32>
    %463 = arith.addf %462, %461 : vector<1x256xf32>
    %464 = arith.mulf %345, %457 : vector<1x256xf32>
    %465 = arith.mulf %450, %461 : vector<1x256xf32>
    %466 = arith.addf %464, %465 : vector<1x256xf32>
    %467 = arith.mulf %348, %457 : vector<1x256xf32>
    %468 = arith.mulf %452, %461 : vector<1x256xf32>
    %469 = arith.addf %467, %468 : vector<1x256xf32>
    %cst_153 = arith.constant 1.000000e+00 : f32
    %470 = vector.broadcast %cst_153 : f32 to vector<1x256xf32>
    %471 = arith.divf %470, %463 : vector<1x256xf32>
    %472 = arith.mulf %466, %471 : vector<1x256xf32>
    %473 = arith.mulf %469, %471 : vector<1x256xf32>
    %c0_154 = arith.constant 0 : index
    %c0_155 = arith.constant 0 : index
    %c0_156 = arith.constant 0 : index
    %474 = vector.load %arg6[%c0_154, %c0_155, %c0_156] : memref<1x1x256xf32, #tpu.memory_space<vmem>>, vector<1x1x256xf32>
    %475 = vector.shape_cast %474 : vector<1x1x256xf32> to vector<1x256xf32>
    %c0_157 = arith.constant 0 : index
    %c0_158 = arith.constant 0 : index
    %c0_159 = arith.constant 0 : index
    %476 = vector.load %arg7[%c0_157, %c0_158, %c0_159] : memref<1x1x256xf32, #tpu.memory_space<vmem>>, vector<1x1x256xf32>
    %477 = vector.shape_cast %476 : vector<1x1x256xf32> to vector<1x256xf32>
    %478 = arith.addf %472, %475 : vector<1x256xf32>
    %cst_160 = arith.constant 0.000000e+00 : f32
    %cst_161 = arith.constant 1.500000e+01 : f32
    %479 = vector.broadcast %cst_160 : f32 to vector<1x256xf32>
    %480 = arith.maximumf %479, %478 : vector<1x256xf32>
    %481 = vector.broadcast %cst_161 : f32 to vector<1x256xf32>
    %482 = arith.minimumf %481, %480 : vector<1x256xf32>
    %483 = arith.subf %482, %475 : vector<1x256xf32>
    %c0_162 = arith.constant 0 : index
    %c0_163 = arith.constant 0 : index
    %c0_164 = arith.constant 0 : index
    %484 = vector.load %arg8[%c0_162, %c0_163, %c0_164] : memref<1x1x256xf32, #tpu.memory_space<vmem>>, vector<1x1x256xf32>
    %485 = vector.shape_cast %484 : vector<1x1x256xf32> to vector<1x256xf32>
    %486 = vector.shape_cast %483 : vector<1x256xf32> to vector<1x1x256xf32>
    tpu.vector_store %arg8[%c0_162, %c0_163, %c0_164], %486 {strides = array<i32>} : memref<1x1x256xf32, #tpu.memory_space<vmem>>, vector<1x1x256xf32>,
    %487 = arith.addf %473, %477 : vector<1x256xf32>
    %cst_165 = arith.constant 0.000000e+00 : f32
    %cst_166 = arith.constant 1.500000e+01 : f32
    %488 = vector.broadcast %cst_165 : f32 to vector<1x256xf32>
    %489 = arith.maximumf %488, %487 : vector<1x256xf32>
    %490 = vector.broadcast %cst_166 : f32 to vector<1x256xf32>
    %491 = arith.minimumf %490, %489 : vector<1x256xf32>
    %492 = arith.subf %491, %477 : vector<1x256xf32>
    %c0_167 = arith.constant 0 : index
    %c0_168 = arith.constant 0 : index
    %c0_169 = arith.constant 0 : index
    %493 = vector.load %arg9[%c0_167, %c0_168, %c0_169] : memref<1x1x256xf32, #tpu.memory_space<vmem>>, vector<1x1x256xf32>
    %494 = vector.shape_cast %493 : vector<1x1x256xf32> to vector<1x256xf32>
    %495 = vector.shape_cast %492 : vector<1x256xf32> to vector<1x1x256xf32>
    tpu.vector_store %arg9[%c0_167, %c0_168, %c0_169], %495 {strides = array<i32>} : memref<1x1x256xf32, #tpu.memory_space<vmem>>, vector<1x1x256xf32>,
    return
  }
  func.func @transform_0(%arg0: i32, %arg1: i32) -> (i32, i32, i32) {
    %c0_i32 = arith.constant 0 : i32
    %c0_i32_0 = arith.constant 0 : i32
    return %arg0, %c0_i32, %arg1 : i32, i32, i32
  }
  func.func @transform_1(%arg0: i32, %arg1: i32) -> (i32, i32, i32, i32) {
    %c0_i32 = arith.constant 0 : i32
    %c0_i32_0 = arith.constant 0 : i32
    %c0_i32_1 = arith.constant 0 : i32
    return %arg0, %c0_i32, %c0_i32_0, %arg1 : i32, i32, i32, i32
  }
  func.func @transform_2(%arg0: i32, %arg1: i32) -> (i32, i32, i32) {
    %c0_i32 = arith.constant 0 : i32
    %c0_i32_0 = arith.constant 0 : i32
    return %arg0, %c0_i32, %arg1 : i32, i32, i32
  }
  func.func @transform_3(%arg0: i32, %arg1: i32) -> (i32, i32, i32) {
    %c0_i32 = arith.constant 0 : i32
    %c0_i32_0 = arith.constant 0 : i32
    return %arg0, %c0_i32, %arg1 : i32, i32, i32
  }
  func.func @transform_4(%arg0: i32, %arg1: i32) -> (i32, i32, i32) {
    %c0_i32 = arith.constant 0 : i32
    %c0_i32_0 = arith.constant 0 : i32
    return %arg0, %c0_i32, %arg1 : i32, i32, i32
  }
  func.func @transform_5(%arg0: i32, %arg1: i32) -> (i32, i32, i32) {
    %c0_i32 = arith.constant 0 : i32
    %c0_i32_0 = arith.constant 0 : i32
    return %arg0, %c0_i32, %arg1 : i32, i32, i32
  }
  func.func @transform_6(%arg0: i32, %arg1: i32) -> (i32, i32, i32) {
    %c0_i32 = arith.constant 0 : i32
    %c0_i32_0 = arith.constant 0 : i32
    return %arg0, %c0_i32, %arg1 : i32, i32, i32
  }
  func.func @transform_7(%arg0: i32, %arg1: i32) -> (i32, i32, i32) {
    %c0_i32 = arith.constant 0 : i32
    %c0_i32_0 = arith.constant 0 : i32
    return %arg0, %c0_i32, %arg1 : i32, i32, i32
  }
}

</mosaic_0001>

<llo_original>
// kernel: evaluate_zm.1
$region0: #{evaluate_zm.1}
  #allocation0 [shape = 'u32[]', space=smem, size = 0x4, offset = 0x4, fixed_abs, tag = 'smem constant byte address 0x4 - core index']
  #allocation1 [shape = 'u32[144,128]{1,0:T(1,128)}', space=vmem, size = 0x12000, scoped, tag = 'internal scratch']
  %s0 = inlined_call_operand.vmem [shape: f32[2,36,256], index: 0, kind: input, shape index: {}]
  %s1 = inlined_call_operand.vmem [shape: f32[2,4,36,256], index: 1, kind: input, shape index: {}]
  %s2 = inlined_call_operand.vmem [shape: f32[2,4,256], index: 2, kind: input, shape index: {}]
  %s3 = inlined_call_operand.vmem [shape: f32[2,4,256], index: 3, kind: input, shape index: {}]
  %s4 = inlined_call_operand.vmem [shape: f32[2,1,256], index: 4, kind: input, shape index: {}]
  %s5 = inlined_call_operand.vmem [shape: f32[2,1,256], index: 5, kind: input, shape index: {}]
  %s6 = inlined_call_operand.vmem [shape: f32[2,1,256], index: 6, kind: output, shape index: {0}]
  %s7 = inlined_call_operand.vmem [shape: f32[2,1,256], index: 7, kind: output, shape index: {1}]
  %8 = xla_tuple %s6, %s7
  %s9 = sld [smem:[#allocation0]]
  $region65: #{evaluate_zm.1} parent=0
    _
  %s11 = ssub.s32 1, %s9
  %s12 = scalar_select 0, %s11, %s9
  loop: start=0, step=1, limit=4
  $region2: #{evaluate_zm.1} parent=0 // loop_pre_header
    _
  $region3: #{evaluate_zm.1} parent=0 // loop_header
    %s14 = sphi 0, %s18
    %p15 = scmp.ge.s32.totalorder %s14, 4
    %s21 = sphi 0, %s33
    %s22 = sphi 0, %s29
    %s23 = sphi 0, %s21
    %s24 = sphi 0, %s22
    %s25 = sphi 0, %s23
    %s26 = sphi 0, %s24
    %s38 = sphi 0, %s40
    %s41 = sphi 0, %s38
    %s42 = sphi 0, %s41
    %s58 = sphi 0, %s42
    %s66 = sphi 0, %s68
    %s69 = sphi 0, %s66
    %s70 = sphi 0, %s69
    %s86 = sphi 0, %s70
    %s94 = sphi 0, %s96
    %s97 = sphi 0, %s94
    %s98 = sphi 0, %s97
    %s114 = sphi 0, %s98
    %s122 = sphi 0, %s124
    %s125 = sphi 0, %s122
    %s126 = sphi 0, %s125
    %s142 = sphi 0, %s126
    %s150 = sphi 0, %s152
    %s153 = sphi 0, %s150
    %s154 = sphi 0, %s153
    %s170 = sphi 0, %s154
    %s178 = sphi 0, %s180
    %s181 = sphi 0, %s178
    %s182 = sphi 0, %s181
    %s198 = sphi 0, %s182
    %s206 = sphi 0, %s208
    %s209 = sphi 0, %s206
    %s210 = sphi 0, %s209
    %s226 = sphi 0, %s210
    %s234 = sphi 0, %s236
    %s237 = sphi 0, %s234
    %s238 = sphi 0, %s237
    %s254 = sphi 0, %s238
  $region4: #{evaluate_zm.1} parent=0 // loop_header_branch
    %17 = sbr.rel (%p15) target = $region8
  $region5: #{evaluate_zm.1} parent=0 // loop_body
    %s19 = ssub.s32 %s14, 1
    %s20 = ssub.s32 %s14, 2
    %s27 = sadd.s32 1, %s22
    %p28 = scmp.ge.s32.totalorder %s27, 1
    %s29 = scalar_select %p28, 0, %s27
    %s30 = sadd.s32 1, %s21
    %s31 = scalar_select %p28, %s30, %s21
    %p32 = scmp.ge.s32.totalorder %s31, 2
    %s33 = scalar_select %p32, 0, %s31
    %s34 = ssub.s32 %s21, %s33
    %s35 = ssub.s32 %s22, %s29
    %s36 = sor.u32 %s34, %s35
    %p37 = scmp.eq.s32.totalorder %s36, 0
    %s39 = sadd.s32 %s38, 1
    %s40 = scalar_select %p37, %s38, %s39
    %p43 = pneg %p37
    %p44 = scmp.eq.s32.totalorder %s14, 1
    %p45 = por %p43, %p44
    %p46 = scmp.ne.s32.totalorder %s38, %s41
    %p47 = scmp.eq.s32.totalorder %s14, 0
    %p48 = por %p46, %p47
    %p49 = scmp.ne.s32.totalorder %s38, %s41
    %p50 = scmp.eq.s32.totalorder %s19, 1
    %p51 = por %p49, %p50
    %p52 = scmp.ne.s32.totalorder %s41, %s42
    %p53 = scmp.eq.s32.totalorder %s19, 0
    %p54 = por %p52, %p53
    %p55 = scmp.ne.s32.totalorder %s41, %s42
    %p56 = scmp.eq.s32.totalorder %s20, 1
    %p57 = por %p55, %p56
    %p59 = scmp.ne.s32.totalorder %s42, %s58
    %p60 = scmp.eq.s32.totalorder %s20, 0
    %p61 = por %p59, %p60
    %s62 = ssub.s32 %s21, %s33
    %s63 = ssub.s32 %s22, %s29
    %s64 = sor.u32 %s62, %s63
    %p65 = scmp.eq.s32.totalorder %s64, 0
    %s67 = sadd.s32 %s66, 1
    %s68 = scalar_select %p65, %s66, %s67
    %p71 = pneg %p65
    %p72 = scmp.eq.s32.totalorder %s14, 1
    %p73 = por %p71, %p72
    %p74 = scmp.ne.s32.totalorder %s66, %s69
    %p75 = scmp.eq.s32.totalorder %s14, 0
    %p76 = por %p74, %p75
    %p77 = scmp.ne.s32.totalorder %s66, %s69
    %p78 = scmp.eq.s32.totalorder %s19, 1
    %p79 = por %p77, %p78
    %p80 = scmp.ne.s32.totalorder %s69, %s70
    %p81 = scmp.eq.s32.totalorder %s19, 0
    %p82 = por %p80, %p81
    %p83 = scmp.ne.s32.totalorder %s69, %s70
    %p84 = scmp.eq.s32.totalorder %s20, 1
    %p85 = por %p83, %p84
    %p87 = scmp.ne.s32.totalorder %s70, %s86
    %p88 = scmp.eq.s32.totalorder %s20, 0
    %p89 = por %p87, %p88
    %s90 = ssub.s32 %s21, %s33
    %s91 = ssub.s32 %s22, %s29
    %s92 = sor.u32 %s90, %s91
    %p93 = scmp.eq.s32.totalorder %s92, 0
    %s95 = sadd.s32 %s94, 1
    %s96 = scalar_select %p93, %s94, %s95
    %p99 = pneg %p93
    %p100 = scmp.eq.s32.totalorder %s14, 1
    %p101 = por %p99, %p100
    %p102 = scmp.ne.s32.totalorder %s94, %s97
    %p103 = scmp.eq.s32.totalorder %s14, 0
    %p104 = por %p102, %p103
    %p105 = scmp.ne.s32.totalorder %s94, %s97
    %p106 = scmp.eq.s32.totalorder %s19, 1
    %p107 = por %p105, %p106
    %p108 = scmp.ne.s32.totalorder %s97, %s98
    %p109 = scmp.eq.s32.totalorder %s19, 0
    %p110 = por %p108, %p109
    %p111 = scmp.ne.s32.totalorder %s97, %s98
    %p112 = scmp.eq.s32.totalorder %s20, 1
    %p113 = por %p111, %p112
    %p115 = scmp.ne.s32.totalorder %s98, %s114
    %p116 = scmp.eq.s32.totalorder %s20, 0
    %p117 = por %p115, %p116
    %s118 = ssub.s32 %s21, %s33
    %s119 = ssub.s32 %s22, %s29
    %s120 = sor.u32 %s118, %s119
    %p121 = scmp.eq.s32.totalorder %s120, 0
    %s123 = sadd.s32 %s122, 1
    %s124 = scalar_select %p121, %s122, %s123
    %p127 = pneg %p121
    %p128 = scmp.eq.s32.totalorder %s14, 1
    %p129 = por %p127, %p128
    %p130 = scmp.ne.s32.totalorder %s122, %s125
    %p131 = scmp.eq.s32.totalorder %s14, 0
    %p132 = por %p130, %p131
    %p133 = scmp.ne.s32.totalorder %s122, %s125
    %p134 = scmp.eq.s32.totalorder %s19, 1
    %p135 = por %p133, %p134
    %p136 = scmp.ne.s32.totalorder %s125, %s126
    %p137 = scmp.eq.s32.totalorder %s19, 0
    %p138 = por %p136, %p137
    %p139 = scmp.ne.s32.totalorder %s125, %s126
    %p140 = scmp.eq.s32.totalorder %s20, 1
    %p141 = por %p139, %p140
    %p143 = scmp.ne.s32.totalorder %s126, %s142
    %p144 = scmp.eq.s32.totalorder %s20, 0
    %p145 = por %p143, %p144
    %s146 = ssub.s32 %s21, %s33
    %s147 = ssub.s32 %s22, %s29
    %s148 = sor.u32 %s146, %s147
    %p149 = scmp.eq.s32.totalorder %s148, 0
    %s151 = sadd.s32 %s150, 1
    %s152 = scalar_select %p149, %s150, %s151
    %p155 = pneg %p149
    %p156 = scmp.eq.s32.totalorder %s14, 1
    %p157 = por %p155, %p156
    %p158 = scmp.ne.s32.totalorder %s150, %s153
    %p159 = scmp.eq.s32.totalorder %s14, 0
    %p160 = por %p158, %p159
    %p161 = scmp.ne.s32.totalorder %s150, %s153
    %p162 = scmp.eq.s32.totalorder %s19, 1
    %p163 = por %p161, %p162
    %p164 = scmp.ne.s32.totalorder %s153, %s154
    %p165 = scmp.eq.s32.totalorder %s19, 0
    %p166 = por %p164, %p165
    %p167 = scmp.ne.s32.totalorder %s153, %s154
    %p168 = scmp.eq.s32.totalorder %s20, 1
    %p169 = por %p167, %p168
    %p171 = scmp.ne.s32.totalorder %s154, %s170
    %p172 = scmp.eq.s32.totalorder %s20, 0
    %p173 = por %p171, %p172
    %s174 = ssub.s32 %s21, %s33
    %s175 = ssub.s32 %s22, %s29
    %s176 = sor.u32 %s174, %s175
    %p177 = scmp.eq.s32.totalorder %s176, 0
    %s179 = sadd.s32 %s178, 1
    %s180 = scalar_select %p177, %s178, %s179
    %p183 = pneg %p177
    %p184 = scmp.eq.s32.totalorder %s14, 1
    %p185 = por %p183, %p184
    %p186 = scmp.ne.s32.totalorder %s178, %s181
    %p187 = scmp.eq.s32.totalorder %s14, 0
    %p188 = por %p186, %p187
    %p189 = scmp.ne.s32.totalorder %s178, %s181
    %p190 = scmp.eq.s32.totalorder %s19, 1
    %p191 = por %p189, %p190
    %p192 = scmp.ne.s32.totalorder %s181, %s182
    %p193 = scmp.eq.s32.totalorder %s19, 0
    %p194 = por %p192, %p193
    %p195 = scmp.ne.s32.totalorder %s181, %s182
    %p196 = scmp.eq.s32.totalorder %s20, 1
    %p197 = por %p195, %p196
    %p199 = scmp.ne.s32.totalorder %s182, %s198
    %p200 = scmp.eq.s32.totalorder %s20, 0
    %p201 = por %p199, %p200
    %s202 = ssub.s32 %s21, %s33
    %s203 = ssub.s32 %s22, %s29
    %s204 = sor.u32 %s202, %s203
    %p205 = scmp.eq.s32.totalorder %s204, 0
    %s207 = sadd.s32 %s206, 1
    %s208 = scalar_select %p205, %s206, %s207
    %p211 = pneg %p205
    %p212 = scmp.eq.s32.totalorder %s14, 1
    %p213 = por %p211, %p212
    %p214 = scmp.ne.s32.totalorder %s206, %s209
    %p215 = scmp.eq.s32.totalorder %s14, 0
    %p216 = por %p214, %p215
    %p217 = scmp.ne.s32.totalorder %s206, %s209
    %p218 = scmp.eq.s32.totalorder %s19, 1
    %p219 = por %p217, %p218
    %p220 = scmp.ne.s32.totalorder %s209, %s210
    %p221 = scmp.eq.s32.totalorder %s19, 0
    %p222 = por %p220, %p221
    %p223 = scmp.ne.s32.totalorder %s209, %s210
    %p224 = scmp.eq.s32.totalorder %s20, 1
    %p225 = por %p223, %p224
    %p227 = scmp.ne.s32.totalorder %s210, %s226
    %p228 = scmp.eq.s32.totalorder %s20, 0
    %p229 = por %p227, %p228
    %s230 = ssub.s32 %s21, %s33
    %s231 = ssub.s32 %s22, %s29
    %s232 = sor.u32 %s230, %s231
    %p233 = scmp.eq.s32.totalorder %s232, 0
    %s235 = sadd.s32 %s234, 1
    %s236 = scalar_select %p233, %s234, %s235
    %p239 = pneg %p233
    %p240 = scmp.eq.s32.totalorder %s14, 1
    %p241 = por %p239, %p240
    %p242 = scmp.ne.s32.totalorder %s234, %s237
    %p243 = scmp.eq.s32.totalorder %s14, 0
    %p244 = por %p242, %p243
    %p245 = scmp.ne.s32.totalorder %s234, %s237
    %p246 = scmp.eq.s32.totalorder %s19, 1
    %p247 = por %p245, %p246
    %p248 = scmp.ne.s32.totalorder %s237, %s238
    %p249 = scmp.eq.s32.totalorder %s19, 0
    %p250 = por %p248, %p249
    %p251 = scmp.ne.s32.totalorder %s237, %s238
    %p252 = scmp.eq.s32.totalorder %s20, 1
    %p253 = por %p251, %p252
    %p255 = scmp.ne.s32.totalorder %s238, %s254
    %p256 = scmp.eq.s32.totalorder %s20, 0
    %p257 = por %p255, %p256
    %p258 = scmp.le.s32.totalorder 1, %s14
    %p259 = scmp.lt.s32.totalorder %s14, 3
    %p260 = pnand %p258, %p259
    %p261 = pneg %p260
    // Predicated region
    $region9: #{evaluate_zm.1} parent=5 // pred_check
      _
    $region10: #{evaluate_zm.1} parent=5 // pred_check_branch
      %263 = sbr.rel (%p260) target = $region12
    $region11: #{evaluate_zm.1} parent=5 // pred_region
      %s264 = ssub.s32 %s14, 1
    $region12: #{evaluate_zm.1} parent=5 // pred_fallthru
      _
    %p265 = scmp.lt.s32.totalorder %s14, 2
    // Predicated region
    $region13: #{evaluate_zm.1} parent=5 // pred_check
      %p266 = pneg %p265
    $region14: #{evaluate_zm.1} parent=5 // pred_check_branch
      %268 = sbr.rel (%p266) target = $region16
    $region15: #{evaluate_zm.1} parent=5 // pred_region
      // Predicated region
      $region17: #{evaluate_zm.1} parent=15 // pred_check
        %p269 = pneg %p48
      $region18: #{evaluate_zm.1} parent=15 // pred_check_branch
        %271 = sbr.rel (%p269) target = $region20
      $region19: #{evaluate_zm.1} parent=15 // pred_region
        %s272 = smul.u32 2, %s22
        %p273 = scmp.lt.s32.totalorder %s21, 1
        %s274 = scalar_select %p273, %s21, 1
        %p275 = scmp.lt.s32.totalorder %s272, 1
        %s276 = scalar_select %p275, %s272, 1
        %s277 = smul.addr %s274, 10
        %s278 = sadd.s32 %s276, %s277
        %s279 = smul.addr %s278, 8
        %s280 = scalar_lea.vmem %s0, %s279
        %s281 = smul.u32 2, %s22
      $region20: #{evaluate_zm.1} parent=15 // pred_fallthru
        _
      // Predicated region
      $region21: #{evaluate_zm.1} parent=15 // pred_check
        %p282 = pneg %p76
      $region22: #{evaluate_zm.1} parent=15 // pred_check_branch
        %284 = sbr.rel (%p282) target = $region24
      $region23: #{evaluate_zm.1} parent=15 // pred_region
        %s285 = smul.u32 2, %s22
        %p286 = scmp.lt.s32.totalorder %s21, 1
        %s287 = scalar_select %p286, %s21, 1
        %p288 = scmp.lt.s32.totalorder %s285, 1
        %s289 = scalar_select %p288, %s285, 1
        %s290 = smul.addr %s287, 40
        %s291 = sadd.s32 %s289, %s290
        %s292 = smul.addr %s291, 8
        %s293 = scalar_lea.vmem %s1, %s292
        %s294 = smul.u32 2, %s22
      $region24: #{evaluate_zm.1} parent=15 // pred_fallthru
        _
      // Predicated region
      $region25: #{evaluate_zm.1} parent=15 // pred_check
        %p295 = pneg %p104
      $region26: #{evaluate_zm.1} parent=15 // pred_check_branch
        %297 = sbr.rel (%p295) target = $region28
      $region27: #{evaluate_zm.1} parent=15 // pred_region
        %s298 = smul.u32 2, %s22
        %p299 = scmp.lt.s32.totalorder %s21, 1
        %s300 = scalar_select %p299, %s21, 1
        %p301 = scmp.lt.s32.totalorder %s298, 1
        %s302 = scalar_select %p301, %s298, 1
        %s303 = smul.addr %s300, 2
        %s304 = sadd.s32 %s302, %s303
        %s305 = smul.addr %s304, 4
        %s306 = scalar_lea.vmem %s2, %s305
        %s307 = smul.u32 2, %s22
      $region28: #{evaluate_zm.1} parent=15 // pred_fallthru
        _
      // Predicated region
      $region29: #{evaluate_zm.1} parent=15 // pred_check
        %p308 = pneg %p132
      $region30: #{evaluate_zm.1} parent=15 // pred_check_branch
        %310 = sbr.rel (%p308) target = $region32
      $region31: #{evaluate_zm.1} parent=15 // pred_region
        %s311 = smul.u32 2, %s22
        %p312 = scmp.lt.s32.totalorder %s21, 1
        %s313 = scalar_select %p312, %s21, 1
        %p314 = scmp.lt.s32.totalorder %s311, 1
        %s315 = scalar_select %p314, %s311, 1
        %s316 = smul.addr %s313, 2
        %s317 = sadd.s32 %s315, %s316
        %s318 = smul.addr %s317, 4
        %s319 = scalar_lea.vmem %s3, %s318
        %s320 = smul.u32 2, %s22
      $region32: #{evaluate_zm.1} parent=15 // pred_fallthru
        _
      // Predicated region
      $region33: #{evaluate_zm.1} parent=15 // pred_check
        %p321 = pneg %p160
      $region34: #{evaluate_zm.1} parent=15 // pred_check_branch
        %323 = sbr.rel (%p321) target = $region36
      $region35: #{evaluate_zm.1} parent=15 // pred_region
        %s324 = smul.u32 2, %s22
        %p325 = scmp.lt.s32.totalorder %s21, 1
        %s326 = scalar_select %p325, %s21, 1
        %p327 = scmp.lt.s32.totalorder %s324, 1
        %s328 = scalar_select %p327, %s324, 1
        %s329 = smul.addr %s326, 2
        %s330 = sadd.s32 %s328, %s329
        %s331 = scalar_lea.vmem %s4, %s330
        %s332 = smul.u32 2, %s22
      $region36: #{evaluate_zm.1} parent=15 // pred_fallthru
        _
      // Predicated region
      $region37: #{evaluate_zm.1} parent=15 // pred_check
        %p333 = pneg %p188
      $region38: #{evaluate_zm.1} parent=15 // pred_check_branch
        %335 = sbr.rel (%p333) target = $region40
      $region39: #{evaluate_zm.1} parent=15 // pred_region
        %s336 = smul.u32 2, %s22
        %p337 = scmp.lt.s32.totalorder %s21, 1
        %s338 = scalar_select %p337, %s21, 1
        %p339 = scmp.lt.s32.totalorder %s336, 1
        %s340 = scalar_select %p339, %s336, 1
        %s341 = smul.addr %s338, 2
        %s342 = sadd.s32 %s340, %s341
        %s343 = scalar_lea.vmem %s5, %s342
        %s344 = smul.u32 2, %s22
      $region40: #{evaluate_zm.1} parent=15 // pred_fallthru
        _
    $region16: #{evaluate_zm.1} parent=5 // pred_fallthru
      _
    %p345 = scmp.le.s32.totalorder 1, %s14
    %p346 = scmp.lt.s32.totalorder %s14, 3
    %p347 = pnand %p345, %p346
    %p348 = pneg %p347
    // Predicated region
    $region41: #{evaluate_zm.1} parent=5 // pred_check
      _
    $region42: #{evaluate_zm.1} parent=5 // pred_check_branch
      %350 = sbr.rel (%p347) target = $region44
    $region43: #{evaluate_zm.1} parent=5 // pred_region
      %s351 = ssub.s32 %s14, 1
      %s352 = smul.u32 2, %s24
      %p353 = scmp.lt.s32.totalorder %s23, 1
      %s354 = scalar_select %p353, %s23, 1
      %p355 = scmp.lt.s32.totalorder %s352, 1
      %s356 = scalar_select %p355, %s352, 1
      %s357 = smul.addr %s354, 10
      %s358 = sadd.s32 %s356, %s357
      %s359 = smul.addr %s358, 8
      %s360 = scalar_lea.vmem %s0, %s359
      %p361 = pneg %p54
      %p362 = pneg %p51
      %s363 = smul.u32 2, %s24
      %p364 = scmp.lt.s32.totalorder %s23, 1
      %s365 = scalar_select %p364, %s23, 1
      %p366 = scmp.lt.s32.totalorder %s363, 1
      %s367 = scalar_select %p366, %s363, 1
      %s368 = smul.addr %s365, 40
      %s369 = sadd.s32 %s367, %s368
      %s370 = smul.addr %s369, 8
      %s371 = scalar_lea.vmem %s1, %s370
      %p372 = pneg %p82
      %p373 = pneg %p79
      %s374 = smul.u32 2, %s24
      %p375 = scmp.lt.s32.totalorder %s23, 1
      %s376 = scalar_select %p375, %s23, 1
      %p377 = scmp.lt.s32.totalorder %s374, 1
      %s378 = scalar_select %p377, %s374, 1
      %s379 = smul.addr %s376, 2
      %s380 = sadd.s32 %s378, %s379
      %s381 = smul.addr %s380, 4
      %s382 = scalar_lea.vmem %s2, %s381
      %p383 = pneg %p110
      %p384 = pneg %p107
      %s385 = smul.u32 2, %s24
      %p386 = scmp.lt.s32.totalorder %s23, 1
      %s387 = scalar_select %p386, %s23, 1
      %p388 = scmp.lt.s32.totalorder %s385, 1
      %s389 = scalar_select %p388, %s385, 1
      %s390 = smul.addr %s387, 2
      %s391 = sadd.s32 %s389, %s390
      %s392 = smul.addr %s391, 4
      %s393 = scalar_lea.vmem %s3, %s392
      %p394 = pneg %p138
      %p395 = pneg %p135
      %s396 = smul.u32 2, %s24
      %p397 = scmp.lt.s32.totalorder %s23, 1
      %s398 = scalar_select %p397, %s23, 1
      %p399 = scmp.lt.s32.totalorder %s396, 1
      %s400 = scalar_select %p399, %s396, 1
      %s401 = smul.addr %s398, 2
      %s402 = sadd.s32 %s400, %s401
      %s403 = scalar_lea.vmem %s4, %s402
      %p404 = pneg %p166
      %p405 = pneg %p163
      %s406 = smul.u32 2, %s24
      %p407 = scmp.lt.s32.totalorder %s23, 1
      %s408 = scalar_select %p407, %s23, 1
      %p409 = scmp.lt.s32.totalorder %s406, 1
      %s410 = scalar_select %p409, %s406, 1
      %s411 = smul.addr %s408, 2
      %s412 = sadd.s32 %s410, %s411
      %s413 = scalar_lea.vmem %s5, %s412
      %p414 = pneg %p194
      %p415 = pneg %p191
      %p416 = pneg %p222
      %p417 = pneg %p219
      %s418 = smul.u32 2, %s24
      %p419 = scmp.lt.s32.totalorder %s23, 1
      %s420 = scalar_select %p419, %s23, 1
      %p421 = scmp.lt.s32.totalorder %s418, 1
      %s422 = scalar_select %p421, %s418, 1
      %s423 = smul.addr %s420, 2
      %s424 = sadd.s32 %s422, %s423
      %s425 = scalar_lea.vmem %s6, %s424
      %p426 = pneg %p250
      %p427 = pneg %p247
      %s428 = smul.u32 2, %s24
      %p429 = scmp.lt.s32.totalorder %s23, 1
      %s430 = scalar_select %p429, %s23, 1
      %p431 = scmp.lt.s32.totalorder %s428, 1
      %s432 = scalar_select %p431, %s428, 1
      %s433 = smul.addr %s430, 2
      %s434 = sadd.s32 %s432, %s433
      %s435 = scalar_lea.vmem %s7, %s434
      %s436 = smul.u32 2, %s24
      %p437 = scmp.lt.s32.totalorder %s23, 1
      %s438 = scalar_select %p437, %s23, 1
      %p439 = scmp.lt.s32.totalorder %s436, 1
      %s440 = scalar_select %p439, %s436, 1
      %s441 = smul.addr %s438, 10
      %s442 = sadd.s32 %s440, %s441
      %s443 = smul.addr %s442, 8
      %s444 = scalar_lea.vmem %s0, %s443
      %s445 = smul.u32 2, %s24
      %s446 = smul.u32 2, %s24
      %p447 = scmp.lt.s32.totalorder %s23, 1
      %s448 = scalar_select %p447, %s23, 1
      %p449 = scmp.lt.s32.totalorder %s446, 1
      %s450 = scalar_select %p449, %s446, 1
      %s451 = smul.addr %s448, 40
      %s452 = sadd.s32 %s450, %s451
      %s453 = smul.addr %s452, 8
      %s454 = scalar_lea.vmem %s1, %s453
      %s455 = smul.u32 2, %s24
      %s456 = smul.u32 2, %s24
      %p457 = scmp.lt.s32.totalorder %s23, 1
      %s458 = scalar_select %p457, %s23, 1
      %p459 = scmp.lt.s32.totalorder %s456, 1
      %s460 = scalar_select %p459, %s456, 1
      %s461 = smul.addr %s458, 2
      %s462 = sadd.s32 %s460, %s461
      %s463 = smul.addr %s462, 4
      %s464 = scalar_lea.vmem %s2, %s463
      %s465 = smul.u32 2, %s24
      %s466 = smul.u32 2, %s24
      %p467 = scmp.lt.s32.totalorder %s23, 1
      %s468 = scalar_select %p467, %s23, 1
      %p469 = scmp.lt.s32.totalorder %s466, 1
      %s470 = scalar_select %p469, %s466, 1
      %s471 = smul.addr %s468, 2
      %s472 = sadd.s32 %s470, %s471
      %s473 = smul.addr %s472, 4
      %s474 = scalar_lea.vmem %s3, %s473
      %s475 = smul.u32 2, %s24
      %s476 = smul.u32 2, %s24
      %p477 = scmp.lt.s32.totalorder %s23, 1
      %s478 = scalar_select %p477, %s23, 1
      %p479 = scmp.lt.s32.totalorder %s476, 1
      %s480 = scalar_select %p479, %s476, 1
      %s481 = smul.addr %s478, 2
      %s482 = sadd.s32 %s480, %s481
      %s483 = scalar_lea.vmem %s4, %s482
      %s484 = smul.u32 2, %s24
      %s485 = smul.u32 2, %s24
      %p486 = scmp.lt.s32.totalorder %s23, 1
      %s487 = scalar_select %p486, %s23, 1
      %p488 = scmp.lt.s32.totalorder %s485, 1
      %s489 = scalar_select %p488, %s485, 1
      %s490 = smul.addr %s487, 2
      %s491 = sadd.s32 %s489, %s490
      %s492 = scalar_lea.vmem %s5, %s491
      %s493 = smul.u32 2, %s24
      %s494 = smul.u32 2, %s24
      %p495 = scmp.lt.s32.totalorder %s23, 1
      %s496 = scalar_select %p495, %s23, 1
      %p497 = scmp.lt.s32.totalorder %s494, 1
      %s498 = scalar_select %p497, %s494, 1
      %s499 = smul.addr %s496, 2
      %s500 = sadd.s32 %s498, %s499
      %s501 = scalar_lea.vmem %s6, %s500
      %s502 = smul.u32 2, %s24
      %s503 = smul.u32 2, %s24
      %p504 = scmp.lt.s32.totalorder %s23, 1
      %s505 = scalar_select %p504, %s23, 1
      %p506 = scmp.lt.s32.totalorder %s503, 1
      %s507 = scalar_select %p506, %s503, 1
      %s508 = smul.addr %s505, 2
      %s509 = sadd.s32 %s507, %s508
      %s510 = scalar_lea.vmem %s7, %s509
      %s511 = smul.u32 2, %s24
      %v512 = vld [vmem:[%s444] sm:$0xff]
      %v513 = vld [vmem:[%s444 + $0x8] sm:$0xff]
      %v514 = vld [vmem:[%s444 + $0x10] sm:$0xff]
      %v515 = vld [vmem:[%s444 + $0x18] sm:$0xff]
      %v516 = vld [vmem:[%s444 + $0x20] sm:$0xff]
      %v517 = vld [vmem:[%s444 + $0x28] sm:$0xff]
      %v518 = vld [vmem:[%s444 + $0x30] sm:$0xff]
      %v519 = vld [vmem:[%s444 + $0x38] sm:$0xff]
      %v520 = vld [vmem:[%s444 + $0x40] sm:$0xf]
      %v521 = vld [vmem:[%s444 + $0x48] sm:$0xf]
      %v522 = vld [vmem:[%s454] sm:$0xff]
      %v523 = vld [vmem:[%s454 + $0x8] sm:$0xff]
      %v524 = vld [vmem:[%s454 + $0x10] sm:$0xff]
      %v525 = vld [vmem:[%s454 + $0x18] sm:$0xff]
      %v526 = vld [vmem:[%s454 + $0x20] sm:$0xff]
      %v527 = vld [vmem:[%s454 + $0x28] sm:$0xff]
      %v528 = vld [vmem:[%s454 + $0x30] sm:$0xff]
      %v529 = vld [vmem:[%s454 + $0x38] sm:$0xff]
      %v530 = vld [vmem:[%s454 + $0x40] sm:$0xf]
      %v531 = vld [vmem:[%s454 + $0x48] sm:$0xf]
      %v532 = vsub.f32 %v512, %v522
      %v533 = vsub.f32 %v513, %v523
      %v534 = vsub.f32 %v514, %v524
      %v535 = vsub.f32 %v515, %v525
      %v536 = vand.u32 2147483647, %v532
      %v537 = vand.u32 2147483647, %v533
      %v538 = vand.u32 2147483647, %v534
      %v539 = vand.u32 2147483647, %v535
      %v540 = vsub.f32 0.0, %v536
      %v541 = vsub.f32 0.0, %v537
      %v542 = vsub.f32 0.0, %v538
      %v543 = vsub.f32 0.0, %v539
      %vm544 = vcmask 1043456
      %v545 = vsel %vm544, %v542, 0.0
      %v546 = vadd.f32 %v540, %v545
      %v547 = vrot.slane %v546, 4
      %v548 = vadd.f32 %v546, %v547
      %v549 = vrot.slane %v548, 2
      %v550 = vadd.f32 %v548, %v549
      %v551 = vrot.slane %v550, 1
      %v552 = vadd.f32 %v550, %v551
      %v553 = vsel %vm544, %v543, 0.0
      %v554 = vadd.f32 %v541, %v553
      %v555 = vrot.slane %v554, 4
      %v556 = vadd.f32 %v554, %v555
      %v557 = vrot.slane %v556, 2
      %v558 = vadd.f32 %v556, %v557
      %v559 = vrot.slane %v558, 1
      %v560 = vadd.f32 %v558, %v559
      %v561 = vrcp.pop 12.0
      %v562 = vmul.f32 %v552, %v561
      %v563 = vmul.f32 %v560, %v561
      %v564 = vsub.f32 %v516, %v526
      %v565 = vsub.f32 %v517, %v527
      %v566 = vand.u32 2147483647, %v564
      %v567 = vand.u32 2147483647, %v565
      %v568 = vsub.f32 0.0, %v566
      %v569 = vsub.f32 0.0, %v567
      %v574 = vrot.slane %v542, 4
      %v575 = vrot.slane %v568, 4
      %v576 = vsel %vm544, %v574, %v575
      %v577 = vrot.slane %v543, 4
      %v578 = vrot.slane %v569, 4
      %v579 = vsel %vm544, %v577, %v578
      %v584 = vsel %vm544, %v575, 0.0
      %v585 = vadd.f32 %v576, %v584
      %v586 = vrot.slane %v585, 4
      %v587 = vadd.f32 %v585, %v586
      %v588 = vrot.slane %v587, 2
      %v589 = vadd.f32 %v587, %v588
      %v590 = vrot.slane %v589, 1
      %v591 = vadd.f32 %v589, %v590
      %v592 = vsel %vm544, %v578, 0.0
      %v593 = vadd.f32 %v579, %v592
      %v594 = vrot.slane %v593, 4
      %v595 = vadd.f32 %v593, %v594
      %v596 = vrot.slane %v595, 2
      %v597 = vadd.f32 %v595, %v596
      %v598 = vrot.slane %v597, 1
      %v599 = vadd.f32 %v597, %v598
      %v600 = vmul.f32 %v591, %v561
      %v601 = vmul.f32 %v599, %v561
      %v602 = vmax.f32 %v562, %v600
      %v603 = vmax.f32 %v563, %v601
      %v604 = vsub.f32 %v518, %v528
      %v605 = vsub.f32 %v519, %v529
      %v606 = vsub.f32 %v520, %v530
      %v607 = vsub.f32 %v521, %v531
      %v608 = vand.u32 2147483647, %v604
      %v609 = vand.u32 2147483647, %v605
      %v610 = vand.u32 2147483647, %v606
      %v611 = vand.u32 2147483647, %v607
      %v612 = vsub.f32 0.0, %v608
      %v613 = vsub.f32 0.0, %v609
      %v614 = vsub.f32 0.0, %v610
      %v615 = vsub.f32 0.0, %v611
      %v616 = vsel %vm544, %v614, 0.0
      %v617 = vadd.f32 %v612, %v616
      %v618 = vrot.slane %v617, 4
      %v619 = vadd.f32 %v617, %v618
      %v620 = vrot.slane %v619, 2
      %v621 = vadd.f32 %v619, %v620
      %v622 = vrot.slane %v621, 1
      %v623 = vadd.f32 %v621, %v622
      %v624 = vsel %vm544, %v615, 0.0
      %v625 = vadd.f32 %v613, %v624
      %v626 = vrot.slane %v625, 4
      %v627 = vadd.f32 %v625, %v626
      %v628 = vrot.slane %v627, 2
      %v629 = vadd.f32 %v627, %v628
      %v630 = vrot.slane %v629, 1
      %v631 = vadd.f32 %v629, %v630
      %v632 = vmul.f32 %v623, %v561
      %v633 = vmul.f32 %v631, %v561
      %v634 = vmax.f32 %v602, %v632
      %v635 = vmax.f32 %v603, %v633
      %v636 = vsub.f32 %v512, %v528
      %v637 = vsub.f32 %v513, %v529
      %v638 = vsub.f32 %v514, %v530
      %v639 = vsub.f32 %v515, %v531
      %v640 = vand.u32 2147483647, %v636
      %v641 = vand.u32 2147483647, %v637
      %v642 = vand.u32 2147483647, %v638
      %v643 = vand.u32 2147483647, %v639
      %v644 = vsub.f32 0.0, %v640
      %v645 = vsub.f32 0.0, %v641
      %v646 = vsub.f32 0.0, %v642
      %v647 = vsub.f32 0.0, %v643
      %v648 = vsel %vm544, %v646, 0.0
      %v649 = vadd.f32 %v644, %v648
      %v650 = vrot.slane %v649, 4
      %v651 = vadd.f32 %v649, %v650
      %v652 = vrot.slane %v651, 2
      %v653 = vadd.f32 %v651, %v652
      %v654 = vrot.slane %v653, 1
      %v655 = vadd.f32 %v653, %v654
      %v656 = vsel %vm544, %v647, 0.0
      %v657 = vadd.f32 %v645, %v656
      %v658 = vrot.slane %v657, 4
      %v659 = vadd.f32 %v657, %v658
      %v660 = vrot.slane %v659, 2
      %v661 = vadd.f32 %v659, %v660
      %v662 = vrot.slane %v661, 1
      %v663 = vadd.f32 %v661, %v662
      %v664 = vmul.f32 %v655, %v561
      %v665 = vmul.f32 %v663, %v561
      %v666 = vmax.f32 %v634, %v664
      %v667 = vmax.f32 %v635, %v665
      %v672 = vrot.slane %v522, 4
      %v673 = vrot.slane %v523, 4
      %v674 = vrot.slane %v524, 4
      %v675 = vsel %vm544, %v672, %v674
      %v676 = vrot.slane %v525, 4
      %v677 = vsel %vm544, %v673, %v676
      %v682 = vsub.f32 %v514, %v672
      %v683 = vsub.f32 %v515, %v673
      %v684 = vsub.f32 %v516, %v675
      %v685 = vsub.f32 %v517, %v677
      %v686 = vand.u32 2147483647, %v682
      %v687 = vand.u32 2147483647, %v683
      %v688 = vand.u32 2147483647, %v684
      %v689 = vand.u32 2147483647, %v685
      %v690 = vsub.f32 0.0, %v686
      %v691 = vsub.f32 0.0, %v687
      %v692 = vsub.f32 0.0, %v688
      %v693 = vsub.f32 0.0, %v689
      %v698 = vrot.slane %v690, 4
      %v699 = vrot.slane %v692, 4
      %v700 = vsel %vm544, %v698, %v699
      %v701 = vrot.slane %v691, 4
      %v702 = vrot.slane %v693, 4
      %v703 = vsel %vm544, %v701, %v702
      %v708 = vsel %vm544, %v699, 0.0
      %v709 = vadd.f32 %v700, %v708
      %v710 = vrot.slane %v709, 4
      %v711 = vadd.f32 %v709, %v710
      %v712 = vrot.slane %v711, 2
      %v713 = vadd.f32 %v711, %v712
      %v714 = vrot.slane %v713, 1
      %v715 = vadd.f32 %v713, %v714
      %v716 = vsel %vm544, %v702, 0.0
      %v717 = vadd.f32 %v703, %v716
      %v718 = vrot.slane %v717, 4
      %v719 = vadd.f32 %v717, %v718
      %v720 = vrot.slane %v719, 2
      %v721 = vadd.f32 %v719, %v720
      %v722 = vrot.slane %v721, 1
      %v723 = vadd.f32 %v721, %v722
      %v724 = vmul.f32 %v715, %v561
      %v725 = vmul.f32 %v723, %v561
      %v726 = vmax.f32 %v666, %v724
      %v727 = vmax.f32 %v667, %v725
      %v730 = vrot.slane %v526, 4
      %v731 = vsel %vm544, %v674, %v730
      %v732 = vrot.slane %v527, 4
      %v733 = vsel %vm544, %v676, %v732
      %v738 = vsub.f32 %v518, %v731
      %v739 = vsub.f32 %v519, %v733
      %v740 = vsub.f32 %v520, %v730
      %v741 = vsub.f32 %v521, %v732
      %v742 = vand.u32 2147483647, %v738
      %v743 = vand.u32 2147483647, %v739
      %v744 = vand.u32 2147483647, %v740
      %v745 = vand.u32 2147483647, %v741
      %v746 = vsub.f32 0.0, %v742
      %v747 = vsub.f32 0.0, %v743
      %v748 = vsub.f32 0.0, %v744
      %v749 = vsub.f32 0.0, %v745
      %v750 = vsel %vm544, %v748, 0.0
      %v751 = vadd.f32 %v746, %v750
      %v752 = vrot.slane %v751, 4
      %v753 = vadd.f32 %v751, %v752
      %v754 = vrot.slane %v753, 2
      %v755 = vadd.f32 %v753, %v754
      %v756 = vrot.slane %v755, 1
      %v757 = vadd.f32 %v755, %v756
      %v758 = vsel %vm544, %v749, 0.0
      %v759 = vadd.f32 %v747, %v758
      %v760 = vrot.slane %v759, 4
      %v761 = vadd.f32 %v759, %v760
      %v762 = vrot.slane %v761, 2
      %v763 = vadd.f32 %v761, %v762
      %v764 = vrot.slane %v763, 1
      %v765 = vadd.f32 %v763, %v764
      %v766 = vmul.f32 %v757, %v561
      %v767 = vmul.f32 %v765, %v561
      %v768 = vmax.f32 %v726, %v766
      %v769 = vmax.f32 %v727, %v767
      %v770 = vsub.f32 %v512, %v731
      %v771 = vsub.f32 %v513, %v733
      %v772 = vsub.f32 %v514, %v730
      %v773 = vsub.f32 %v515, %v732
      %v774 = vand.u32 2147483647, %v770
      %v775 = vand.u32 2147483647, %v771
      %v776 = vand.u32 2147483647, %v772
      %v777 = vand.u32 2147483647, %v773
      %v778 = vsub.f32 0.0, %v774
      %v779 = vsub.f32 0.0, %v775
      %v780 = vsub.f32 0.0, %v776
      %v781 = vsub.f32 0.0, %v777
      %v782 = vsel %vm544, %v780, 0.0
      %v783 = vadd.f32 %v778, %v782
      %v784 = vrot.slane %v783, 4
      %v785 = vadd.f32 %v783, %v784
      %v786 = vrot.slane %v785, 2
      %v787 = vadd.f32 %v785, %v786
      %v788 = vrot.slane %v787, 1
      %v789 = vadd.f32 %v787, %v788
      %v790 = vsel %vm544, %v781, 0.0
      %v791 = vadd.f32 %v779, %v790
      %v792 = vrot.slane %v791, 4
      %v793 = vadd.f32 %v791, %v792
      %v794 = vrot.slane %v793, 2
      %v795 = vadd.f32 %v793, %v794
      %v796 = vrot.slane %v795, 1
      %v797 = vadd.f32 %v795, %v796
      %v798 = vmul.f32 %v789, %v561
      %v799 = vmul.f32 %v797, %v561
      %v800 = vmax.f32 %v768, %v798
      %v801 = vmax.f32 %v769, %v799
      %v806 = vrot.slane %v528, 4
      %v807 = vrot.slane %v529, 4
      %v808 = vrot.slane %v530, 4
      %v809 = vsel %vm544, %v806, %v808
      %v810 = vrot.slane %v531, 4
      %v811 = vsel %vm544, %v807, %v810
      %v816 = vsub.f32 %v514, %v806
      %v817 = vsub.f32 %v515, %v807
      %v818 = vsub.f32 %v516, %v809
      %v819 = vsub.f32 %v517, %v811
      %v820 = vand.u32 2147483647, %v816
      %v821 = vand.u32 2147483647, %v817
      %v822 = vand.u32 2147483647, %v818
      %v823 = vand.u32 2147483647, %v819
      %v824 = vsub.f32 0.0, %v820
      %v825 = vsub.f32 0.0, %v821
      %v826 = vsub.f32 0.0, %v822
      %v827 = vsub.f32 0.0, %v823
      %v832 = vrot.slane %v824, 4
      %v833 = vrot.slane %v826, 4
      %v834 = vsel %vm544, %v832, %v833
      %v835 = vrot.slane %v825, 4
      %v836 = vrot.slane %v827, 4
      %v837 = vsel %vm544, %v835, %v836
      %v842 = vsel %vm544, %v833, 0.0
      %v843 = vadd.f32 %v834, %v842
      %v844 = vrot.slane %v843, 4
      %v845 = vadd.f32 %v843, %v844
      %v846 = vrot.slane %v845, 2
      %v847 = vadd.f32 %v845, %v846
      %v848 = vrot.slane %v847, 1
      %v849 = vadd.f32 %v847, %v848
      %v850 = vsel %vm544, %v836, 0.0
      %v851 = vadd.f32 %v837, %v850
      %v852 = vrot.slane %v851, 4
      %v853 = vadd.f32 %v851, %v852
      %v854 = vrot.slane %v853, 2
      %v855 = vadd.f32 %v853, %v854
      %v856 = vrot.slane %v855, 1
      %v857 = vadd.f32 %v855, %v856
      %v858 = vmul.f32 %v849, %v561
      %v859 = vmul.f32 %v857, %v561
      %v860 = vmax.f32 %v800, %v858
      %v861 = vmax.f32 %v801, %v859
      %v862 = vsub.f32 %v518, %v522
      %v863 = vsub.f32 %v519, %v523
      %v864 = vsub.f32 %v520, %v524
      %v865 = vsub.f32 %v521, %v525
      %v866 = vand.u32 2147483647, %v862
      %v867 = vand.u32 2147483647, %v863
      %v868 = vand.u32 2147483647, %v864
      %v869 = vand.u32 2147483647, %v865
      %v870 = vsub.f32 0.0, %v866
      %v871 = vsub.f32 0.0, %v867
      %v872 = vsub.f32 0.0, %v868
      %v873 = vsub.f32 0.0, %v869
      %v874 = vsel %vm544, %v872, 0.0
      %v875 = vadd.f32 %v870, %v874
      %v876 = vrot.slane %v875, 4
      %v877 = vadd.f32 %v875, %v876
      %v878 = vrot.slane %v877, 2
      %v879 = vadd.f32 %v877, %v878
      %v880 = vrot.slane %v879, 1
      %v881 = vadd.f32 %v879, %v880
      %v882 = vsel %vm544, %v873, 0.0
      %v883 = vadd.f32 %v871, %v882
      %v884 = vrot.slane %v883, 4
      %v885 = vadd.f32 %v883, %v884
      %v886 = vrot.slane %v885, 2
      %v887 = vadd.f32 %v885, %v886
      %v888 = vrot.slane %v887, 1
      %v889 = vadd.f32 %v887, %v888
      %v890 = vmul.f32 %v881, %v561
      %v891 = vmul.f32 %v889, %v561
      %v892 = vmax.f32 %v860, %v890
      %v893 = vmax.f32 %v861, %v891
      %v894 = vld [vmem:[%s464] ss:$4 sm:$0x3]
      %v895 = vld [vmem:[%s474] ss:$4 sm:$0x3]
      %s896 = scalar_lea.vmem %s454, 80
      %v897 = vld [vmem:[%s896] sm:$0xff]
      %v898 = vld [vmem:[%s896 + $0x8] sm:$0xff]
      %v899 = vld [vmem:[%s896 + $0x10] sm:$0xff]
      %v900 = vld [vmem:[%s896 + $0x18] sm:$0xff]
      %v901 = vld [vmem:[%s896 + $0x20] sm:$0xff]
      %v902 = vld [vmem:[%s896 + $0x28] sm:$0xff]
      %v903 = vld [vmem:[%s896 + $0x30] sm:$0xff]
      %v904 = vld [vmem:[%s896 + $0x38] sm:$0xff]
      %v905 = vld [vmem:[%s896 + $0x40] sm:$0xf]
      %v906 = vld [vmem:[%s896 + $0x48] sm:$0xf]
      %v907 = vsub.f32 %v512, %v897
      %v908 = vsub.f32 %v513, %v898
      %v909 = vsub.f32 %v514, %v899
      %v910 = vsub.f32 %v515, %v900
      %v911 = vand.u32 2147483647, %v907
      %v912 = vand.u32 2147483647, %v908
      %v913 = vand.u32 2147483647, %v909
      %v914 = vand.u32 2147483647, %v910
      %v915 = vsub.f32 0.0, %v911
      %v916 = vsub.f32 0.0, %v912
      %v917 = vsub.f32 0.0, %v913
      %v918 = vsub.f32 0.0, %v914
      %v919 = vsel %vm544, %v917, 0.0
      %v920 = vadd.f32 %v915, %v919
      %v921 = vrot.slane %v920, 4
      %v922 = vadd.f32 %v920, %v921
      %v923 = vrot.slane %v922, 2
      %v924 = vadd.f32 %v922, %v923
      %v925 = vrot.slane %v924, 1
      %v926 = vadd.f32 %v924, %v925
      %v927 = vsel %vm544, %v918, 0.0
      %v928 = vadd.f32 %v916, %v927
      %v929 = vrot.slane %v928, 4
      %v930 = vadd.f32 %v928, %v929
      %v931 = vrot.slane %v930, 2
      %v932 = vadd.f32 %v930, %v931
      %v933 = vrot.slane %v932, 1
      %v934 = vadd.f32 %v932, %v933
      %v935 = vmul.f32 %v926, %v561
      %v936 = vmul.f32 %v934, %v561
      %v937 = vsub.f32 %v516, %v901
      %v938 = vsub.f32 %v517, %v902
      %v939 = vand.u32 2147483647, %v937
      %v940 = vand.u32 2147483647, %v938
      %v941 = vsub.f32 0.0, %v939
      %v942 = vsub.f32 0.0, %v940
      %v947 = vrot.slane %v917, 4
      %v948 = vrot.slane %v941, 4
      %v949 = vsel %vm544, %v947, %v948
      %v950 = vrot.slane %v918, 4
      %v951 = vrot.slane %v942, 4
      %v952 = vsel %vm544, %v950, %v951
      %v957 = vsel %vm544, %v948, 0.0
      %v958 = vadd.f32 %v949, %v957
      %v959 = vrot.slane %v958, 4
      %v960 = vadd.f32 %v958, %v959
      %v961 = vrot.slane %v960, 2
      %v962 = vadd.f32 %v960, %v961
      %v963 = vrot.slane %v962, 1
      %v964 = vadd.f32 %v962, %v963
      %v965 = vsel %vm544, %v951, 0.0
      %v966 = vadd.f32 %v952, %v965
      %v967 = vrot.slane %v966, 4
      %v968 = vadd.f32 %v966, %v967
      %v969 = vrot.slane %v968, 2
      %v970 = vadd.f32 %v968, %v969
      %v971 = vrot.slane %v970, 1
      %v972 = vadd.f32 %v970, %v971
      %v973 = vmul.f32 %v964, %v561
      %v974 = vmul.f32 %v972, %v561
      %v975 = vmax.f32 %v935, %v973
      %v976 = vmax.f32 %v936, %v974
      %v977 = vsub.f32 %v518, %v903
      %v978 = vsub.f32 %v519, %v904
      %v979 = vsub.f32 %v520, %v905
      %v980 = vsub.f32 %v521, %v906
      %v981 = vand.u32 2147483647, %v977
      %v982 = vand.u32 2147483647, %v978
      %v983 = vand.u32 2147483647, %v979
      %v984 = vand.u32 2147483647, %v980
      %v985 = vsub.f32 0.0, %v981
      %v986 = vsub.f32 0.0, %v982
      %v987 = vsub.f32 0.0, %v983
      %v988 = vsub.f32 0.0, %v984
      %v989 = vsel %vm544, %v987, 0.0
      %v990 = vadd.f32 %v985, %v989
      %v991 = vrot.slane %v990, 4
      %v992 = vadd.f32 %v990, %v991
      %v993 = vrot.slane %v992, 2
      %v994 = vadd.f32 %v992, %v993
      %v995 = vrot.slane %v994, 1
      %v996 = vadd.f32 %v994, %v995
      %v997 = vsel %vm544, %v988, 0.0
      %v998 = vadd.f32 %v986, %v997
      %v999 = vrot.slane %v998, 4
      %v1000 = vadd.f32 %v998, %v999
      %v1001 = vrot.slane %v1000, 2
      %v1002 = vadd.f32 %v1000, %v1001
      %v1003 = vrot.slane %v1002, 1
      %v1004 = vadd.f32 %v1002, %v1003
      %v1005 = vmul.f32 %v996, %v561
      %v1006 = vmul.f32 %v1004, %v561
      %v1007 = vmax.f32 %v975, %v1005
      %v1008 = vmax.f32 %v976, %v1006
      %v1009 = vsub.f32 %v512, %v903
      %v1010 = vsub.f32 %v513, %v904
      %v1011 = vsub.f32 %v514, %v905
      %v1012 = vsub.f32 %v515, %v906
      %v1013 = vand.u32 2147483647, %v1009
      %v1014 = vand.u32 2147483647, %v1010
      %v1015 = vand.u32 2147483647, %v1011
      %v1016 = vand.u32 2147483647, %v1012
      %v1017 = vsub.f32 0.0, %v1013
      %v1018 = vsub.f32 0.0, %v1014
      %v1019 = vsub.f32 0.0, %v1015
      %v1020 = vsub.f32 0.0, %v1016
      %v1021 = vsel %vm544, %v1019, 0.0
      %v1022 = vadd.f32 %v1017, %v1021
      %v1023 = vrot.slane %v1022, 4
      %v1024 = vadd.f32 %v1022, %v1023
      %v1025 = vrot.slane %v1024, 2
      %v1026 = vadd.f32 %v1024, %v1025
      %v1027 = vrot.slane %v1026, 1
      %v1028 = vadd.f32 %v1026, %v1027
      %v1029 = vsel %vm544, %v1020, 0.0
      %v1030 = vadd.f32 %v1018, %v1029
      %v1031 = vrot.slane %v1030, 4
      %v1032 = vadd.f32 %v1030, %v1031
      %v1033 = vrot.slane %v1032, 2
      %v1034 = vadd.f32 %v1032, %v1033
      %v1035 = vrot.slane %v1034, 1
      %v1036 = vadd.f32 %v1034, %v1035
      %v1037 = vmul.f32 %v1028, %v561
      %v1038 = vmul.f32 %v1036, %v561
      %v1039 = vmax.f32 %v1007, %v1037
      %v1040 = vmax.f32 %v1008, %v1038
      %v1045 = vrot.slane %v897, 4
      %v1046 = vrot.slane %v898, 4
      %v1047 = vrot.slane %v899, 4
      %v1048 = vsel %vm544, %v1045, %v1047
      %v1049 = vrot.slane %v900, 4
      %v1050 = vsel %vm544, %v1046, %v1049
      %v1055 = vsub.f32 %v514, %v1045
      %v1056 = vsub.f32 %v515, %v1046
      %v1057 = vsub.f32 %v516, %v1048
      %v1058 = vsub.f32 %v517, %v1050
      %v1059 = vand.u32 2147483647, %v1055
      %v1060 = vand.u32 2147483647, %v1056
      %v1061 = vand.u32 2147483647, %v1057
      %v1062 = vand.u32 2147483647, %v1058
      %v1063 = vsub.f32 0.0, %v1059
      %v1064 = vsub.f32 0.0, %v1060
      %v1065 = vsub.f32 0.0, %v1061
      %v1066 = vsub.f32 0.0, %v1062
      %v1071 = vrot.slane %v1063, 4
      %v1072 = vrot.slane %v1065, 4
      %v1073 = vsel %vm544, %v1071, %v1072
      %v1074 = vrot.slane %v1064, 4
      %v1075 = vrot.slane %v1066, 4
      %v1076 = vsel %vm544, %v1074, %v1075
      %v1081 = vsel %vm544, %v1072, 0.0
      %v1082 = vadd.f32 %v1073, %v1081
      %v1083 = vrot.slane %v1082, 4
      %v1084 = vadd.f32 %v1082, %v1083
      %v1085 = vrot.slane %v1084, 2
      %v1086 = vadd.f32 %v1084, %v1085
      %v1087 = vrot.slane %v1086, 1
      %v1088 = vadd.f32 %v1086, %v1087
      %v1089 = vsel %vm544, %v1075, 0.0
      %v1090 = vadd.f32 %v1076, %v1089
      %v1091 = vrot.slane %v1090, 4
      %v1092 = vadd.f32 %v1090, %v1091
      %v1093 = vrot.slane %v1092, 2
      %v1094 = vadd.f32 %v1092, %v1093
      %v1095 = vrot.slane %v1094, 1
      %v1096 = vadd.f32 %v1094, %v1095
      %v1097 = vmul.f32 %v1088, %v561
      %v1098 = vmul.f32 %v1096, %v561
      %v1099 = vmax.f32 %v1039, %v1097
      %v1100 = vmax.f32 %v1040, %v1098
      %v1103 = vrot.slane %v901, 4
      %v1104 = vsel %vm544, %v1047, %v1103
      %v1105 = vrot.slane %v902, 4
      %v1106 = vsel %vm544, %v1049, %v1105
      %v1111 = vsub.f32 %v518, %v1104
      %v1112 = vsub.f32 %v519, %v1106
      %v1113 = vsub.f32 %v520, %v1103
      %v1114 = vsub.f32 %v521, %v1105
      %v1115 = vand.u32 2147483647, %v1111
      %v1116 = vand.u32 2147483647, %v1112
      %v1117 = vand.u32 2147483647, %v1113
      %v1118 = vand.u32 2147483647, %v1114
      %v1119 = vsub.f32 0.0, %v1115
      %v1120 = vsub.f32 0.0, %v1116
      %v1121 = vsub.f32 0.0, %v1117
      %v1122 = vsub.f32 0.0, %v1118
      %v1123 = vsel %vm544, %v1121, 0.0
      %v1124 = vadd.f32 %v1119, %v1123
      %v1125 = vrot.slane %v1124, 4
      %v1126 = vadd.f32 %v1124, %v1125
      %v1127 = vrot.slane %v1126, 2
      %v1128 = vadd.f32 %v1126, %v1127
      %v1129 = vrot.slane %v1128, 1
      %v1130 = vadd.f32 %v1128, %v1129
      %v1131 = vsel %vm544, %v1122, 0.0
      %v1132 = vadd.f32 %v1120, %v1131
      %v1133 = vrot.slane %v1132, 4
      %v1134 = vadd.f32 %v1132, %v1133
      %v1135 = vrot.slane %v1134, 2
      %v1136 = vadd.f32 %v1134, %v1135
      %v1137 = vrot.slane %v1136, 1
      %v1138 = vadd.f32 %v1136, %v1137
      %v1139 = vmul.f32 %v1130, %v561
      %v1140 = vmul.f32 %v1138, %v561
      %v1141 = vmax.f32 %v1099, %v1139
      %v1142 = vmax.f32 %v1100, %v1140
      %v1143 = vsub.f32 %v512, %v1104
      %v1144 = vsub.f32 %v513, %v1106
      %v1145 = vsub.f32 %v514, %v1103
      %v1146 = vsub.f32 %v515, %v1105
      %v1147 = vand.u32 2147483647, %v1143
      %v1148 = vand.u32 2147483647, %v1144
      %v1149 = vand.u32 2147483647, %v1145
      %v1150 = vand.u32 2147483647, %v1146
      %v1151 = vsub.f32 0.0, %v1147
      %v1152 = vsub.f32 0.0, %v1148
      %v1153 = vsub.f32 0.0, %v1149
      %v1154 = vsub.f32 0.0, %v1150
      %v1155 = vsel %vm544, %v1153, 0.0
      %v1156 = vadd.f32 %v1151, %v1155
      %v1157 = vrot.slane %v1156, 4
      %v1158 = vadd.f32 %v1156, %v1157
      %v1159 = vrot.slane %v1158, 2
      %v1160 = vadd.f32 %v1158, %v1159
      %v1161 = vrot.slane %v1160, 1
      %v1162 = vadd.f32 %v1160, %v1161
      %v1163 = vsel %vm544, %v1154, 0.0
      %v1164 = vadd.f32 %v1152, %v1163
      %v1165 = vrot.slane %v1164, 4
      %v1166 = vadd.f32 %v1164, %v1165
      %v1167 = vrot.slane %v1166, 2
      %v1168 = vadd.f32 %v1166, %v1167
      %v1169 = vrot.slane %v1168, 1
      %v1170 = vadd.f32 %v1168, %v1169
      %v1171 = vmul.f32 %v1162, %v561
      %v1172 = vmul.f32 %v1170, %v561
      %v1173 = vmax.f32 %v1141, %v1171
      %v1174 = vmax.f32 %v1142, %v1172
      %v1179 = vrot.slane %v903, 4
      %v1180 = vrot.slane %v904, 4
      %v1181 = vrot.slane %v905, 4
      %v1182 = vsel %vm544, %v1179, %v1181
      %v1183 = vrot.slane %v906, 4
      %v1184 = vsel %vm544, %v1180, %v1183
      %v1189 = vsub.f32 %v514, %v1179
      %v1190 = vsub.f32 %v515, %v1180
      %v1191 = vsub.f32 %v516, %v1182
      %v1192 = vsub.f32 %v517, %v1184
      %v1193 = vand.u32 2147483647, %v1189
      %v1194 = vand.u32 2147483647, %v1190
      %v1195 = vand.u32 2147483647, %v1191
      %v1196 = vand.u32 2147483647, %v1192
      %v1197 = vsub.f32 0.0, %v1193
      %v1198 = vsub.f32 0.0, %v1194
      %v1199 = vsub.f32 0.0, %v1195
      %v1200 = vsub.f32 0.0, %v1196
      %v1205 = vrot.slane %v1197, 4
      %v1206 = vrot.slane %v1199, 4
      %v1207 = vsel %vm544, %v1205, %v1206
      %v1208 = vrot.slane %v1198, 4
      %v1209 = vrot.slane %v1200, 4
      %v1210 = vsel %vm544, %v1208, %v1209
      %v1215 = vsel %vm544, %v1206, 0.0
      %v1216 = vadd.f32 %v1207, %v1215
      %v1217 = vrot.slane %v1216, 4
      %v1218 = vadd.f32 %v1216, %v1217
      %v1219 = vrot.slane %v1218, 2
      %v1220 = vadd.f32 %v1218, %v1219
      %v1221 = vrot.slane %v1220, 1
      %v1222 = vadd.f32 %v1220, %v1221
      %v1223 = vsel %vm544, %v1209, 0.0
      %v1224 = vadd.f32 %v1210, %v1223
      %v1225 = vrot.slane %v1224, 4
      %v1226 = vadd.f32 %v1224, %v1225
      %v1227 = vrot.slane %v1226, 2
      %v1228 = vadd.f32 %v1226, %v1227
      %v1229 = vrot.slane %v1228, 1
      %v1230 = vadd.f32 %v1228, %v1229
      %v1231 = vmul.f32 %v1222, %v561
      %v1232 = vmul.f32 %v1230, %v561
      %v1233 = vmax.f32 %v1173, %v1231
      %v1234 = vmax.f32 %v1174, %v1232
      %v1235 = vsub.f32 %v518, %v897
      %v1236 = vsub.f32 %v519, %v898
      %v1237 = vsub.f32 %v520, %v899
      %v1238 = vsub.f32 %v521, %v900
      %v1239 = vand.u32 2147483647, %v1235
      %v1240 = vand.u32 2147483647, %v1236
      %v1241 = vand.u32 2147483647, %v1237
      %v1242 = vand.u32 2147483647, %v1238
      %v1243 = vsub.f32 0.0, %v1239
      %v1244 = vsub.f32 0.0, %v1240
      %v1245 = vsub.f32 0.0, %v1241
      %v1246 = vsub.f32 0.0, %v1242
      %v1247 = vsel %vm544, %v1245, 0.0
      %v1248 = vadd.f32 %v1243, %v1247
      %v1249 = vrot.slane %v1248, 4
      %v1250 = vadd.f32 %v1248, %v1249
      %v1251 = vrot.slane %v1250, 2
      %v1252 = vadd.f32 %v1250, %v1251
      %v1253 = vrot.slane %v1252, 1
      %v1254 = vadd.f32 %v1252, %v1253
      %v1255 = vsel %vm544, %v1246, 0.0
      %v1256 = vadd.f32 %v1244, %v1255
      %v1257 = vrot.slane %v1256, 4
      %v1258 = vadd.f32 %v1256, %v1257
      %v1259 = vrot.slane %v1258, 2
      %v1260 = vadd.f32 %v1258, %v1259
      %v1261 = vrot.slane %v1260, 1
      %v1262 = vadd.f32 %v1260, %v1261
      %v1263 = vmul.f32 %v1254, %v561
      %v1264 = vmul.f32 %v1262, %v561
      %v1265 = vmax.f32 %v1233, %v1263
      %v1266 = vmax.f32 %v1234, %v1264
      %s1267 = scalar_lea.vmem %s464, 1
      %v1268 = vld [vmem:[%s1267] ss:$4 sm:$0x3]
      %s1269 = scalar_lea.vmem %s474, 1
      %v1270 = vld [vmem:[%s1269] ss:$4 sm:$0x3]
      %v1271 = vmax.f32 %v892, %v1265
      %v1272 = vmax.f32 %v893, %v1266
      %v1273 = vsub.f32 %v892, %v1271
      %v1274 = vsub.f32 %v893, %v1272
      %v1275 = vmul.f32 %v1273, 1000.0
      %v1276 = vmul.f32 %v1274, 1000.0
      %v1277 = vmul.f32 %v1275, 1.442695
      %v1278 = vpow.pop %v1277
      %v1279 = vmul.f32 %v1276, 1.442695
      %v1280 = vpow.pop %v1279
      %v1281 = vsub.f32 %v1265, %v1271
      %v1282 = vsub.f32 %v1266, %v1272
      %v1283 = vmul.f32 %v1281, 1000.0
      %v1284 = vmul.f32 %v1282, 1000.0
      %v1285 = vmul.f32 %v1283, 1.442695
      %v1286 = vpow.pop %v1285
      %v1287 = vmul.f32 %v1284, 1.442695
      %v1288 = vpow.pop %v1287
      %v1289 = vadd.f32 %v1278, %v1286
      %v1290 = vadd.f32 %v1280, %v1288
      %v1293 = vcombine.low %v1278, %v1280
      %v1295 = vunpack.c.l.s4 1966171168
      %v1296 = vunpack.c.0.s8 %v1295
      %v1297 = vlaneseq
      %v1298 = vshrl.u32 %v1297, 7
      %v1299 = vsub.s32 %v1296, %v1298
      %v1300 = vrot.slane %v1293, %v1299
      %v1302 = vunpack.c.l.s4 1966171168
      %v1303 = vunpack.c.0.s8 %v1302
      %v1304 = vlaneseq
      %v1305 = vshrl.u32 %v1304, 7
      %v1306 = vsub.s32 %v1303, %v1305
      %v1307 = vrot.slane %v1300, %v1306
      %v1309 = vmul.f32 %v894, %v1307
      %v1312 = vcombine.low %v1286, %v1288
      %v1314 = vunpack.c.l.s4 1966171168
      %v1315 = vunpack.c.0.s8 %v1314
      %v1316 = vlaneseq
      %v1317 = vshrl.u32 %v1316, 7
      %v1318 = vsub.s32 %v1315, %v1317
      %v1319 = vrot.slane %v1312, %v1318
      %v1321 = vunpack.c.l.s4 1966171168
      %v1322 = vunpack.c.0.s8 %v1321
      %v1323 = vlaneseq
      %v1324 = vshrl.u32 %v1323, 7
      %v1325 = vsub.s32 %v1322, %v1324
      %v1326 = vrot.slane %v1319, %v1325
      %v1328 = vmul.f32 %v1268, %v1326
      %v1329 = vadd.f32 %v1309, %v1328
      %v1330 = vmul.f32 %v895, %v1307
      %v1331 = vmul.f32 %v1270, %v1326
      %v1332 = vadd.f32 %v1330, %v1331
      %s1333 = scalar_lea.vmem %s454, 160
      %v1334 = vld [vmem:[%s1333] sm:$0xff]
      %v1335 = vld [vmem:[%s1333 + $0x8] sm:$0xff]
      %v1336 = vld [vmem:[%s1333 + $0x10] sm:$0xff]
      %v1337 = vld [vmem:[%s1333 + $0x18] sm:$0xff]
      %v1338 = vld [vmem:[%s1333 + $0x20] sm:$0xff]
      %v1339 = vld [vmem:[%s1333 + $0x28] sm:$0xff]
      %v1340 = vld [vmem:[%s1333 + $0x30] sm:$0xff]
      %v1341 = vld [vmem:[%s1333 + $0x38] sm:$0xff]
      %v1342 = vld [vmem:[%s1333 + $0x40] sm:$0xf]
      %v1343 = vld [vmem:[%s1333 + $0x48] sm:$0xf]
      %v1344 = vsub.f32 %v512, %v1334
      %v1345 = vsub.f32 %v513, %v1335
      %v1346 = vsub.f32 %v514, %v1336
      %v1347 = vsub.f32 %v515, %v1337
      %v1348 = vand.u32 2147483647, %v1344
      %v1349 = vand.u32 2147483647, %v1345
      %v1350 = vand.u32 2147483647, %v1346
      %v1351 = vand.u32 2147483647, %v1347
      %v1352 = vsub.f32 0.0, %v1348
      %v1353 = vsub.f32 0.0, %v1349
      %v1354 = vsub.f32 0.0, %v1350
      %v1355 = vsub.f32 0.0, %v1351
      %v1356 = vsel %vm544, %v1354, 0.0
      %v1357 = vadd.f32 %v1352, %v1356
      %v1358 = vrot.slane %v1357, 4
      %v1359 = vadd.f32 %v1357, %v1358
      %v1360 = vrot.slane %v1359, 2
      %v1361 = vadd.f32 %v1359, %v1360
      %v1362 = vrot.slane %v1361, 1
      %v1363 = vadd.f32 %v1361, %v1362
      %v1364 = vsel %vm544, %v1355, 0.0
      %v1365 = vadd.f32 %v1353, %v1364
      %v1366 = vrot.slane %v1365, 4
      %v1367 = vadd.f32 %v1365, %v1366
      %v1368 = vrot.slane %v1367, 2
      %v1369 = vadd.f32 %v1367, %v1368
      %v1370 = vrot.slane %v1369, 1
      %v1371 = vadd.f32 %v1369, %v1370
      %v1372 = vmul.f32 %v1363, %v561
      %v1373 = vmul.f32 %v1371, %v561
      %v1374 = vsub.f32 %v516, %v1338
      %v1375 = vsub.f32 %v517, %v1339
      %v1376 = vand.u32 2147483647, %v1374
      %v1377 = vand.u32 2147483647, %v1375
      %v1378 = vsub.f32 0.0, %v1376
      %v1379 = vsub.f32 0.0, %v1377
      %v1384 = vrot.slane %v1354, 4
      %v1385 = vrot.slane %v1378, 4
      %v1386 = vsel %vm544, %v1384, %v1385
      %v1387 = vrot.slane %v1355, 4
      %v1388 = vrot.slane %v1379, 4
      %v1389 = vsel %vm544, %v1387, %v1388
      %v1394 = vsel %vm544, %v1385, 0.0
      %v1395 = vadd.f32 %v1386, %v1394
      %v1396 = vrot.slane %v1395, 4
      %v1397 = vadd.f32 %v1395, %v1396
      %v1398 = vrot.slane %v1397, 2
      %v1399 = vadd.f32 %v1397, %v1398
      %v1400 = vrot.slane %v1399, 1
      %v1401 = vadd.f32 %v1399, %v1400
      %v1402 = vsel %vm544, %v1388, 0.0
      %v1403 = vadd.f32 %v1389, %v1402
      %v1404 = vrot.slane %v1403, 4
      %v1405 = vadd.f32 %v1403, %v1404
      %v1406 = vrot.slane %v1405, 2
      %v1407 = vadd.f32 %v1405, %v1406
      %v1408 = vrot.slane %v1407, 1
      %v1409 = vadd.f32 %v1407, %v1408
      %v1410 = vmul.f32 %v1401, %v561
      %v1411 = vmul.f32 %v1409, %v561
      %v1412 = vmax.f32 %v1372, %v1410
      %v1413 = vmax.f32 %v1373, %v1411
      %v1414 = vsub.f32 %v518, %v1340
      %v1415 = vsub.f32 %v519, %v1341
      %v1416 = vsub.f32 %v520, %v1342
      %v1417 = vsub.f32 %v521, %v1343
      %v1418 = vand.u32 2147483647, %v1414
      %v1419 = vand.u32 2147483647, %v1415
      %v1420 = vand.u32 2147483647, %v1416
      %v1421 = vand.u32 2147483647, %v1417
      %v1422 = vsub.f32 0.0, %v1418
      %v1423 = vsub.f32 0.0, %v1419
      %v1424 = vsub.f32 0.0, %v1420
      %v1425 = vsub.f32 0.0, %v1421
      %v1426 = vsel %vm544, %v1424, 0.0
      %v1427 = vadd.f32 %v1422, %v1426
      %v1428 = vrot.slane %v1427, 4
      %v1429 = vadd.f32 %v1427, %v1428
      %v1430 = vrot.slane %v1429, 2
      %v1431 = vadd.f32 %v1429, %v1430
      %v1432 = vrot.slane %v1431, 1
      %v1433 = vadd.f32 %v1431, %v1432
      %v1434 = vsel %vm544, %v1425, 0.0
      %v1435 = vadd.f32 %v1423, %v1434
      %v1436 = vrot.slane %v1435, 4
      %v1437 = vadd.f32 %v1435, %v1436
      %v1438 = vrot.slane %v1437, 2
      %v1439 = vadd.f32 %v1437, %v1438
      %v1440 = vrot.slane %v1439, 1
      %v1441 = vadd.f32 %v1439, %v1440
      %v1442 = vmul.f32 %v1433, %v561
      %v1443 = vmul.f32 %v1441, %v561
      %v1444 = vmax.f32 %v1412, %v1442
      %v1445 = vmax.f32 %v1413, %v1443
      %v1446 = vsub.f32 %v512, %v1340
      %v1447 = vsub.f32 %v513, %v1341
      %v1448 = vsub.f32 %v514, %v1342
      %v1449 = vsub.f32 %v515, %v1343
      %v1450 = vand.u32 2147483647, %v1446
      %v1451 = vand.u32 2147483647, %v1447
      %v1452 = vand.u32 2147483647, %v1448
      %v1453 = vand.u32 2147483647, %v1449
      %v1454 = vsub.f32 0.0, %v1450
      %v1455 = vsub.f32 0.0, %v1451
      %v1456 = vsub.f32 0.0, %v1452
      %v1457 = vsub.f32 0.0, %v1453
      %v1458 = vsel %vm544, %v1456, 0.0
      %v1459 = vadd.f32 %v1454, %v1458
      %v1460 = vrot.slane %v1459, 4
      %v1461 = vadd.f32 %v1459, %v1460
      %v1462 = vrot.slane %v1461, 2
      %v1463 = vadd.f32 %v1461, %v1462
      %v1464 = vrot.slane %v1463, 1
      %v1465 = vadd.f32 %v1463, %v1464
      %v1466 = vsel %vm544, %v1457, 0.0
      %v1467 = vadd.f32 %v1455, %v1466
      %v1468 = vrot.slane %v1467, 4
      %v1469 = vadd.f32 %v1467, %v1468
      %v1470 = vrot.slane %v1469, 2
      %v1471 = vadd.f32 %v1469, %v1470
      %v1472 = vrot.slane %v1471, 1
      %v1473 = vadd.f32 %v1471, %v1472
      %v1474 = vmul.f32 %v1465, %v561
      %v1475 = vmul.f32 %v1473, %v561
      %v1476 = vmax.f32 %v1444, %v1474
      %v1477 = vmax.f32 %v1445, %v1475
      %v1482 = vrot.slane %v1334, 4
      %v1483 = vrot.slane %v1335, 4
      %v1484 = vrot.slane %v1336, 4
      %v1485 = vsel %vm544, %v1482, %v1484
      %v1486 = vrot.slane %v1337, 4
      %v1487 = vsel %vm544, %v1483, %v1486
      %v1492 = vsub.f32 %v514, %v1482
      %v1493 = vsub.f32 %v515, %v1483
      %v1494 = vsub.f32 %v516, %v1485
      %v1495 = vsub.f32 %v517, %v1487
      %v1496 = vand.u32 2147483647, %v1492
      %v1497 = vand.u32 2147483647, %v1493
      %v1498 = vand.u32 2147483647, %v1494
      %v1499 = vand.u32 2147483647, %v1495
      %v1500 = vsub.f32 0.0, %v1496
      %v1501 = vsub.f32 0.0, %v1497
      %v1502 = vsub.f32 0.0, %v1498
      %v1503 = vsub.f32 0.0, %v1499
      %v1508 = vrot.slane %v1500, 4
      %v1509 = vrot.slane %v1502, 4
      %v1510 = vsel %vm544, %v1508, %v1509
      %v1511 = vrot.slane %v1501, 4
      %v1512 = vrot.slane %v1503, 4
      %v1513 = vsel %vm544, %v1511, %v1512
      %v1518 = vsel %vm544, %v1509, 0.0
      %v1519 = vadd.f32 %v1510, %v1518
      %v1520 = vrot.slane %v1519, 4
      %v1521 = vadd.f32 %v1519, %v1520
      %v1522 = vrot.slane %v1521, 2
      %v1523 = vadd.f32 %v1521, %v1522
      %v1524 = vrot.slane %v1523, 1
      %v1525 = vadd.f32 %v1523, %v1524
      %v1526 = vsel %vm544, %v1512, 0.0
      %v1527 = vadd.f32 %v1513, %v1526
      %v1528 = vrot.slane %v1527, 4
      %v1529 = vadd.f32 %v1527, %v1528
      %v1530 = vrot.slane %v1529, 2
      %v1531 = vadd.f32 %v1529, %v1530
      %v1532 = vrot.slane %v1531, 1
      %v1533 = vadd.f32 %v1531, %v1532
      %v1534 = vmul.f32 %v1525, %v561
      %v1535 = vmul.f32 %v1533, %v561
      %v1536 = vmax.f32 %v1476, %v1534
      %v1537 = vmax.f32 %v1477, %v1535
      %v1540 = vrot.slane %v1338, 4
      %v1541 = vsel %vm544, %v1484, %v1540
      %v1542 = vrot.slane %v1339, 4
      %v1543 = vsel %vm544, %v1486, %v1542
      %v1548 = vsub.f32 %v518, %v1541
      %v1549 = vsub.f32 %v519, %v1543
      %v1550 = vsub.f32 %v520, %v1540
      %v1551 = vsub.f32 %v521, %v1542
      %v1552 = vand.u32 2147483647, %v1548
      %v1553 = vand.u32 2147483647, %v1549
      %v1554 = vand.u32 2147483647, %v1550
      %v1555 = vand.u32 2147483647, %v1551
      %v1556 = vsub.f32 0.0, %v1552
      %v1557 = vsub.f32 0.0, %v1553
      %v1558 = vsub.f32 0.0, %v1554
      %v1559 = vsub.f32 0.0, %v1555
      %v1560 = vsel %vm544, %v1558, 0.0
      %v1561 = vadd.f32 %v1556, %v1560
      %v1562 = vrot.slane %v1561, 4
      %v1563 = vadd.f32 %v1561, %v1562
      %v1564 = vrot.slane %v1563, 2
      %v1565 = vadd.f32 %v1563, %v1564
      %v1566 = vrot.slane %v1565, 1
      %v1567 = vadd.f32 %v1565, %v1566
      %v1568 = vsel %vm544, %v1559, 0.0
      %v1569 = vadd.f32 %v1557, %v1568
      %v1570 = vrot.slane %v1569, 4
      %v1571 = vadd.f32 %v1569, %v1570
      %v1572 = vrot.slane %v1571, 2
      %v1573 = vadd.f32 %v1571, %v1572
      %v1574 = vrot.slane %v1573, 1
      %v1575 = vadd.f32 %v1573, %v1574
      %v1576 = vmul.f32 %v1567, %v561
      %v1577 = vmul.f32 %v1575, %v561
      %v1578 = vmax.f32 %v1536, %v1576
      %v1579 = vmax.f32 %v1537, %v1577
      %v1580 = vsub.f32 %v512, %v1541
      %v1581 = vsub.f32 %v513, %v1543
      %v1582 = vsub.f32 %v514, %v1540
      %v1583 = vsub.f32 %v515, %v1542
      %v1584 = vand.u32 2147483647, %v1580
      %v1585 = vand.u32 2147483647, %v1581
      %v1586 = vand.u32 2147483647, %v1582
      %v1587 = vand.u32 2147483647, %v1583
      %v1588 = vsub.f32 0.0, %v1584
      %v1589 = vsub.f32 0.0, %v1585
      %v1590 = vsub.f32 0.0, %v1586
      %v1591 = vsub.f32 0.0, %v1587
      %v1592 = vsel %vm544, %v1590, 0.0
      %v1593 = vadd.f32 %v1588, %v1592
      %v1594 = vrot.slane %v1593, 4
      %v1595 = vadd.f32 %v1593, %v1594
      %v1596 = vrot.slane %v1595, 2
      %v1597 = vadd.f32 %v1595, %v1596
      %v1598 = vrot.slane %v1597, 1
      %v1599 = vadd.f32 %v1597, %v1598
      %v1600 = vsel %vm544, %v1591, 0.0
      %v1601 = vadd.f32 %v1589, %v1600
      %v1602 = vrot.slane %v1601, 4
      %v1603 = vadd.f32 %v1601, %v1602
      %v1604 = vrot.slane %v1603, 2
      %v1605 = vadd.f32 %v1603, %v1604
      %v1606 = vrot.slane %v1605, 1
      %v1607 = vadd.f32 %v1605, %v1606
      %v1608 = vmul.f32 %v1599, %v561
      %v1609 = vmul.f32 %v1607, %v561
      %v1610 = vmax.f32 %v1578, %v1608
      %v1611 = vmax.f32 %v1579, %v1609
      %v1616 = vrot.slane %v1340, 4
      %v1617 = vrot.slane %v1341, 4
      %v1618 = vrot.slane %v1342, 4
      %v1619 = vsel %vm544, %v1616, %v1618
      %v1620 = vrot.slane %v1343, 4
      %v1621 = vsel %vm544, %v1617, %v1620
      %v1626 = vsub.f32 %v514, %v1616
      %v1627 = vsub.f32 %v515, %v1617
      %v1628 = vsub.f32 %v516, %v1619
      %v1629 = vsub.f32 %v517, %v1621
      %v1630 = vand.u32 2147483647, %v1626
      %v1631 = vand.u32 2147483647, %v1627
      %v1632 = vand.u32 2147483647, %v1628
      %v1633 = vand.u32 2147483647, %v1629
      %v1634 = vsub.f32 0.0, %v1630
      %v1635 = vsub.f32 0.0, %v1631
      %v1636 = vsub.f32 0.0, %v1632
      %v1637 = vsub.f32 0.0, %v1633
      %v1642 = vrot.slane %v1634, 4
      %v1643 = vrot.slane %v1636, 4
      %v1644 = vsel %vm544, %v1642, %v1643
      %v1645 = vrot.slane %v1635, 4
      %v1646 = vrot.slane %v1637, 4
      %v1647 = vsel %vm544, %v1645, %v1646
      %v1652 = vsel %vm544, %v1643, 0.0
      %v1653 = vadd.f32 %v1644, %v1652
      %v1654 = vrot.slane %v1653, 4
      %v1655 = vadd.f32 %v1653, %v1654
      %v1656 = vrot.slane %v1655, 2
      %v1657 = vadd.f32 %v1655, %v1656
      %v1658 = vrot.slane %v1657, 1
      %v1659 = vadd.f32 %v1657, %v1658
      %v1660 = vsel %vm544, %v1646, 0.0
      %v1661 = vadd.f32 %v1647, %v1660
      %v1662 = vrot.slane %v1661, 4
      %v1663 = vadd.f32 %v1661, %v1662
      %v1664 = vrot.slane %v1663, 2
      %v1665 = vadd.f32 %v1663, %v1664
      %v1666 = vrot.slane %v1665, 1
      %v1667 = vadd.f32 %v1665, %v1666
      %v1668 = vmul.f32 %v1659, %v561
      %v1669 = vmul.f32 %v1667, %v561
      %v1670 = vmax.f32 %v1610, %v1668
      %v1671 = vmax.f32 %v1611, %v1669
      %v1672 = vsub.f32 %v518, %v1334
      %v1673 = vsub.f32 %v519, %v1335
      %v1674 = vsub.f32 %v520, %v1336
      %v1675 = vsub.f32 %v521, %v1337
      %v1676 = vand.u32 2147483647, %v1672
      %v1677 = vand.u32 2147483647, %v1673
      %v1678 = vand.u32 2147483647, %v1674
      %v1679 = vand.u32 2147483647, %v1675
      %v1680 = vsub.f32 0.0, %v1676
      %v1681 = vsub.f32 0.0, %v1677
      %v1682 = vsub.f32 0.0, %v1678
      %v1683 = vsub.f32 0.0, %v1679
      %v1684 = vsel %vm544, %v1682, 0.0
      %v1685 = vadd.f32 %v1680, %v1684
      %v1686 = vrot.slane %v1685, 4
      %v1687 = vadd.f32 %v1685, %v1686
      %v1688 = vrot.slane %v1687, 2
      %v1689 = vadd.f32 %v1687, %v1688
      %v1690 = vrot.slane %v1689, 1
      %v1691 = vadd.f32 %v1689, %v1690
      %v1692 = vsel %vm544, %v1683, 0.0
      %v1693 = vadd.f32 %v1681, %v1692
      %v1694 = vrot.slane %v1693, 4
      %v1695 = vadd.f32 %v1693, %v1694
      %v1696 = vrot.slane %v1695, 2
      %v1697 = vadd.f32 %v1695, %v1696
      %v1698 = vrot.slane %v1697, 1
      %v1699 = vadd.f32 %v1697, %v1698
      %v1700 = vmul.f32 %v1691, %v561
      %v1701 = vmul.f32 %v1699, %v561
      %v1702 = vmax.f32 %v1670, %v1700
      %v1703 = vmax.f32 %v1671, %v1701
      %s1704 = scalar_lea.vmem %s464, 2
      %v1705 = vld [vmem:[%s1704] ss:$4 sm:$0x3]
      %s1706 = scalar_lea.vmem %s474, 2
      %v1707 = vld [vmem:[%s1706] ss:$4 sm:$0x3]
      %v1708 = vmax.f32 %v1271, %v1702
      %v1709 = vmax.f32 %v1272, %v1703
      %v1710 = vsub.f32 %v1271, %v1708
      %v1711 = vsub.f32 %v1272, %v1709
      %v1712 = vmul.f32 %v1710, 1000.0
      %v1713 = vmul.f32 %v1711, 1000.0
      %v1714 = vmul.f32 %v1712, 1.442695
      %v1715 = vpow.pop %v1714
      %v1716 = vmul.f32 %v1713, 1.442695
      %v1717 = vpow.pop %v1716
      %v1718 = vsub.f32 %v1702, %v1708
      %v1719 = vsub.f32 %v1703, %v1709
      %v1720 = vmul.f32 %v1718, 1000.0
      %v1721 = vmul.f32 %v1719, 1000.0
      %v1722 = vmul.f32 %v1720, 1.442695
      %v1723 = vpow.pop %v1722
      %v1724 = vmul.f32 %v1721, 1.442695
      %v1725 = vpow.pop %v1724
      %v1726 = vmul.f32 %v1289, %v1715
      %v1727 = vmul.f32 %v1290, %v1717
      %v1728 = vadd.f32 %v1726, %v1723
      %v1729 = vadd.f32 %v1727, %v1725
      %v1732 = vcombine.low %v1715, %v1717
      %v1734 = vunpack.c.l.s4 1966171168
      %v1735 = vunpack.c.0.s8 %v1734
      %v1736 = vlaneseq
      %v1737 = vshrl.u32 %v1736, 7
      %v1738 = vsub.s32 %v1735, %v1737
      %v1739 = vrot.slane %v1732, %v1738
      %v1741 = vunpack.c.l.s4 1966171168
      %v1742 = vunpack.c.0.s8 %v1741
      %v1743 = vlaneseq
      %v1744 = vshrl.u32 %v1743, 7
      %v1745 = vsub.s32 %v1742, %v1744
      %v1746 = vrot.slane %v1739, %v1745
      %v1748 = vmul.f32 %v1329, %v1746
      %v1751 = vcombine.low %v1723, %v1725
      %v1753 = vunpack.c.l.s4 1966171168
      %v1754 = vunpack.c.0.s8 %v1753
      %v1755 = vlaneseq
      %v1756 = vshrl.u32 %v1755, 7
      %v1757 = vsub.s32 %v1754, %v1756
      %v1758 = vrot.slane %v1751, %v1757
      %v1760 = vunpack.c.l.s4 1966171168
      %v1761 = vunpack.c.0.s8 %v1760
      %v1762 = vlaneseq
      %v1763 = vshrl.u32 %v1762, 7
      %v1764 = vsub.s32 %v1761, %v1763
      %v1765 = vrot.slane %v1758, %v1764
      %v1767 = vmul.f32 %v1705, %v1765
      %v1768 = vadd.f32 %v1748, %v1767
      %v1769 = vmul.f32 %v1332, %v1746
      %v1770 = vmul.f32 %v1707, %v1765
      %v1771 = vadd.f32 %v1769, %v1770
      %s1772 = scalar_lea.vmem %s454, 240
      %v1773 = vld [vmem:[%s1772] sm:$0xff]
      %v1774 = vld [vmem:[%s1772 + $0x8] sm:$0xff]
      %v1775 = vld [vmem:[%s1772 + $0x10] sm:$0xff]
      %v1776 = vld [vmem:[%s1772 + $0x18] sm:$0xff]
      %v1777 = vld [vmem:[%s1772 + $0x20] sm:$0xff]
      %v1778 = vld [vmem:[%s1772 + $0x28] sm:$0xff]
      %v1779 = vld [vmem:[%s1772 + $0x30] sm:$0xff]
      %v1780 = vld [vmem:[%s1772 + $0x38] sm:$0xff]
      %v1781 = vld [vmem:[%s1772 + $0x40] sm:$0xf]
      %v1782 = vld [vmem:[%s1772 + $0x48] sm:$0xf]
      %v1783 = vsub.f32 %v512, %v1773
      %v1784 = vsub.f32 %v513, %v1774
      %v1785 = vsub.f32 %v514, %v1775
      %v1786 = vsub.f32 %v515, %v1776
      %v1787 = vand.u32 2147483647, %v1783
      %v1788 = vand.u32 2147483647, %v1784
      %v1789 = vand.u32 2147483647, %v1785
      %v1790 = vand.u32 2147483647, %v1786
      %v1791 = vsub.f32 0.0, %v1787
      %v1792 = vsub.f32 0.0, %v1788
      %v1793 = vsub.f32 0.0, %v1789
      %v1794 = vsub.f32 0.0, %v1790
      %v1795 = vsel %vm544, %v1793, 0.0
      %v1796 = vadd.f32 %v1791, %v1795
      %v1797 = vrot.slane %v1796, 4
      %v1798 = vadd.f32 %v1796, %v1797
      %v1799 = vrot.slane %v1798, 2
      %v1800 = vadd.f32 %v1798, %v1799
      %v1801 = vrot.slane %v1800, 1
      %v1802 = vadd.f32 %v1800, %v1801
      %v1803 = vsel %vm544, %v1794, 0.0
      %v1804 = vadd.f32 %v1792, %v1803
      %v1805 = vrot.slane %v1804, 4
      %v1806 = vadd.f32 %v1804, %v1805
      %v1807 = vrot.slane %v1806, 2
      %v1808 = vadd.f32 %v1806, %v1807
      %v1809 = vrot.slane %v1808, 1
      %v1810 = vadd.f32 %v1808, %v1809
      %v1811 = vmul.f32 %v1802, %v561
      %v1812 = vmul.f32 %v1810, %v561
      %v1813 = vsub.f32 %v516, %v1777
      %v1814 = vsub.f32 %v517, %v1778
      %v1815 = vand.u32 2147483647, %v1813
      %v1816 = vand.u32 2147483647, %v1814
      %v1817 = vsub.f32 0.0, %v1815
      %v1818 = vsub.f32 0.0, %v1816
      %v1823 = vrot.slane %v1793, 4
      %v1824 = vrot.slane %v1817, 4
      %v1825 = vsel %vm544, %v1823, %v1824
      %v1826 = vrot.slane %v1794, 4
      %v1827 = vrot.slane %v1818, 4
      %v1828 = vsel %vm544, %v1826, %v1827
      %v1833 = vsel %vm544, %v1824, 0.0
      %v1834 = vadd.f32 %v1825, %v1833
      %v1835 = vrot.slane %v1834, 4
      %v1836 = vadd.f32 %v1834, %v1835
      %v1837 = vrot.slane %v1836, 2
      %v1838 = vadd.f32 %v1836, %v1837
      %v1839 = vrot.slane %v1838, 1
      %v1840 = vadd.f32 %v1838, %v1839
      %v1841 = vsel %vm544, %v1827, 0.0
      %v1842 = vadd.f32 %v1828, %v1841
      %v1843 = vrot.slane %v1842, 4
      %v1844 = vadd.f32 %v1842, %v1843
      %v1845 = vrot.slane %v1844, 2
      %v1846 = vadd.f32 %v1844, %v1845
      %v1847 = vrot.slane %v1846, 1
      %v1848 = vadd.f32 %v1846, %v1847
      %v1849 = vmul.f32 %v1840, %v561
      %v1850 = vmul.f32 %v1848, %v561
      %v1851 = vmax.f32 %v1811, %v1849
      %v1852 = vmax.f32 %v1812, %v1850
      %v1853 = vsub.f32 %v518, %v1779
      %v1854 = vsub.f32 %v519, %v1780
      %v1855 = vsub.f32 %v520, %v1781
      %v1856 = vsub.f32 %v521, %v1782
      %v1857 = vand.u32 2147483647, %v1853
      %v1858 = vand.u32 2147483647, %v1854
      %v1859 = vand.u32 2147483647, %v1855
      %v1860 = vand.u32 2147483647, %v1856
      %v1861 = vsub.f32 0.0, %v1857
      %v1862 = vsub.f32 0.0, %v1858
      %v1863 = vsub.f32 0.0, %v1859
      %v1864 = vsub.f32 0.0, %v1860
      %v1865 = vsel %vm544, %v1863, 0.0
      %v1866 = vadd.f32 %v1861, %v1865
      %v1867 = vrot.slane %v1866, 4
      %v1868 = vadd.f32 %v1866, %v1867
      %v1869 = vrot.slane %v1868, 2
      %v1870 = vadd.f32 %v1868, %v1869
      %v1871 = vrot.slane %v1870, 1
      %v1872 = vadd.f32 %v1870, %v1871
      %v1873 = vsel %vm544, %v1864, 0.0
      %v1874 = vadd.f32 %v1862, %v1873
      %v1875 = vrot.slane %v1874, 4
      %v1876 = vadd.f32 %v1874, %v1875
      %v1877 = vrot.slane %v1876, 2
      %v1878 = vadd.f32 %v1876, %v1877
      %v1879 = vrot.slane %v1878, 1
      %v1880 = vadd.f32 %v1878, %v1879
      %v1881 = vmul.f32 %v1872, %v561
      %v1882 = vmul.f32 %v1880, %v561
      %v1883 = vmax.f32 %v1851, %v1881
      %v1884 = vmax.f32 %v1852, %v1882
      %v1885 = vsub.f32 %v512, %v1779
      %v1886 = vsub.f32 %v513, %v1780
      %v1887 = vsub.f32 %v514, %v1781
      %v1888 = vsub.f32 %v515, %v1782
      %v1889 = vand.u32 2147483647, %v1885
      %v1890 = vand.u32 2147483647, %v1886
      %v1891 = vand.u32 2147483647, %v1887
      %v1892 = vand.u32 2147483647, %v1888
      %v1893 = vsub.f32 0.0, %v1889
      %v1894 = vsub.f32 0.0, %v1890
      %v1895 = vsub.f32 0.0, %v1891
      %v1896 = vsub.f32 0.0, %v1892
      %v1897 = vsel %vm544, %v1895, 0.0
      %v1898 = vadd.f32 %v1893, %v1897
      %v1899 = vrot.slane %v1898, 4
      %v1900 = vadd.f32 %v1898, %v1899
      %v1901 = vrot.slane %v1900, 2
      %v1902 = vadd.f32 %v1900, %v1901
      %v1903 = vrot.slane %v1902, 1
      %v1904 = vadd.f32 %v1902, %v1903
      %v1905 = vsel %vm544, %v1896, 0.0
      %v1906 = vadd.f32 %v1894, %v1905
      %v1907 = vrot.slane %v1906, 4
      %v1908 = vadd.f32 %v1906, %v1907
      %v1909 = vrot.slane %v1908, 2
      %v1910 = vadd.f32 %v1908, %v1909
      %v1911 = vrot.slane %v1910, 1
      %v1912 = vadd.f32 %v1910, %v1911
      %v1913 = vmul.f32 %v1904, %v561
      %v1914 = vmul.f32 %v1912, %v561
      %v1915 = vmax.f32 %v1883, %v1913
      %v1916 = vmax.f32 %v1884, %v1914
      %v1921 = vrot.slane %v1773, 4
      %v1922 = vrot.slane %v1774, 4
      %v1923 = vrot.slane %v1775, 4
      %v1924 = vsel %vm544, %v1921, %v1923
      %v1925 = vrot.slane %v1776, 4
      %v1926 = vsel %vm544, %v1922, %v1925
      %v1931 = vsub.f32 %v514, %v1921
      %v1932 = vsub.f32 %v515, %v1922
      %v1933 = vsub.f32 %v516, %v1924
      %v1934 = vsub.f32 %v517, %v1926
      %v1935 = vand.u32 2147483647, %v1931
      %v1936 = vand.u32 2147483647, %v1932
      %v1937 = vand.u32 2147483647, %v1933
      %v1938 = vand.u32 2147483647, %v1934
      %v1939 = vsub.f32 0.0, %v1935
      %v1940 = vsub.f32 0.0, %v1936
      %v1941 = vsub.f32 0.0, %v1937
      %v1942 = vsub.f32 0.0, %v1938
      %v1947 = vrot.slane %v1939, 4
      %v1948 = vrot.slane %v1941, 4
      %v1949 = vsel %vm544, %v1947, %v1948
      %v1950 = vrot.slane %v1940, 4
      %v1951 = vrot.slane %v1942, 4
      %v1952 = vsel %vm544, %v1950, %v1951
      %v1957 = vsel %vm544, %v1948, 0.0
      %v1958 = vadd.f32 %v1949, %v1957
      %v1959 = vrot.slane %v1958, 4
      %v1960 = vadd.f32 %v1958, %v1959
      %v1961 = vrot.slane %v1960, 2
      %v1962 = vadd.f32 %v1960, %v1961
      %v1963 = vrot.slane %v1962, 1
      %v1964 = vadd.f32 %v1962, %v1963
      %v1965 = vsel %vm544, %v1951, 0.0
      %v1966 = vadd.f32 %v1952, %v1965
      %v1967 = vrot.slane %v1966, 4
      %v1968 = vadd.f32 %v1966, %v1967
      %v1969 = vrot.slane %v1968, 2
      %v1970 = vadd.f32 %v1968, %v1969
      %v1971 = vrot.slane %v1970, 1
      %v1972 = vadd.f32 %v1970, %v1971
      %v1973 = vmul.f32 %v1964, %v561
      %v1974 = vmul.f32 %v1972, %v561
      %v1975 = vmax.f32 %v1915, %v1973
      %v1976 = vmax.f32 %v1916, %v1974
      %v1979 = vrot.slane %v1777, 4
      %v1980 = vsel %vm544, %v1923, %v1979
      %v1981 = vrot.slane %v1778, 4
      %v1982 = vsel %vm544, %v1925, %v1981
      %v1987 = vsub.f32 %v518, %v1980
      %v1988 = vsub.f32 %v519, %v1982
      %v1989 = vsub.f32 %v520, %v1979
      %v1990 = vsub.f32 %v521, %v1981
      %v1991 = vand.u32 2147483647, %v1987
      %v1992 = vand.u32 2147483647, %v1988
      %v1993 = vand.u32 2147483647, %v1989
      %v1994 = vand.u32 2147483647, %v1990
      %v1995 = vsub.f32 0.0, %v1991
      %v1996 = vsub.f32 0.0, %v1992
      %v1997 = vsub.f32 0.0, %v1993
      %v1998 = vsub.f32 0.0, %v1994
      %v1999 = vsel %vm544, %v1997, 0.0
      %v2000 = vadd.f32 %v1995, %v1999
      %v2001 = vrot.slane %v2000, 4
      %v2002 = vadd.f32 %v2000, %v2001
      %v2003 = vrot.slane %v2002, 2
      %v2004 = vadd.f32 %v2002, %v2003
      %v2005 = vrot.slane %v2004, 1
      %v2006 = vadd.f32 %v2004, %v2005
      %v2007 = vsel %vm544, %v1998, 0.0
      %v2008 = vadd.f32 %v1996, %v2007
      %v2009 = vrot.slane %v2008, 4
      %v2010 = vadd.f32 %v2008, %v2009
      %v2011 = vrot.slane %v2010, 2
      %v2012 = vadd.f32 %v2010, %v2011
      %v2013 = vrot.slane %v2012, 1
      %v2014 = vadd.f32 %v2012, %v2013
      %v2015 = vmul.f32 %v2006, %v561
      %v2016 = vmul.f32 %v2014, %v561
      %v2017 = vmax.f32 %v1975, %v2015
      %v2018 = vmax.f32 %v1976, %v2016
      %v2019 = vsub.f32 %v512, %v1980
      %v2020 = vsub.f32 %v513, %v1982
      %v2021 = vsub.f32 %v514, %v1979
      %v2022 = vsub.f32 %v515, %v1981
      %v2023 = vand.u32 2147483647, %v2019
      %v2024 = vand.u32 2147483647, %v2020
      %v2025 = vand.u32 2147483647, %v2021
      %v2026 = vand.u32 2147483647, %v2022
      %v2027 = vsub.f32 0.0, %v2023
      %v2028 = vsub.f32 0.0, %v2024
      %v2029 = vsub.f32 0.0, %v2025
      %v2030 = vsub.f32 0.0, %v2026
      %v2031 = vsel %vm544, %v2029, 0.0
      %v2032 = vadd.f32 %v2027, %v2031
      %v2033 = vrot.slane %v2032, 4
      %v2034 = vadd.f32 %v2032, %v2033
      %v2035 = vrot.slane %v2034, 2
      %v2036 = vadd.f32 %v2034, %v2035
      %v2037 = vrot.slane %v2036, 1
      %v2038 = vadd.f32 %v2036, %v2037
      %v2039 = vsel %vm544, %v2030, 0.0
      %v2040 = vadd.f32 %v2028, %v2039
      %v2041 = vrot.slane %v2040, 4
      %v2042 = vadd.f32 %v2040, %v2041
      %v2043 = vrot.slane %v2042, 2
      %v2044 = vadd.f32 %v2042, %v2043
      %v2045 = vrot.slane %v2044, 1
      %v2046 = vadd.f32 %v2044, %v2045
      %v2047 = vmul.f32 %v2038, %v561
      %v2048 = vmul.f32 %v2046, %v561
      %v2049 = vmax.f32 %v2017, %v2047
      %v2050 = vmax.f32 %v2018, %v2048
      %v2055 = vrot.slane %v1779, 4
      %v2056 = vrot.slane %v1780, 4
      %v2057 = vrot.slane %v1781, 4
      %v2058 = vsel %vm544, %v2055, %v2057
      %v2059 = vrot.slane %v1782, 4
      %v2060 = vsel %vm544, %v2056, %v2059
      %v2065 = vsub.f32 %v514, %v2055
      %v2066 = vsub.f32 %v515, %v2056
      %v2067 = vsub.f32 %v516, %v2058
      %v2068 = vsub.f32 %v517, %v2060
      %v2069 = vand.u32 2147483647, %v2065
      %v2070 = vand.u32 2147483647, %v2066
      %v2071 = vand.u32 2147483647, %v2067
      %v2072 = vand.u32 2147483647, %v2068
      %v2073 = vsub.f32 0.0, %v2069
      %v2074 = vsub.f32 0.0, %v2070
      %v2075 = vsub.f32 0.0, %v2071
      %v2076 = vsub.f32 0.0, %v2072
      %v2081 = vrot.slane %v2073, 4
      %v2082 = vrot.slane %v2075, 4
      %v2083 = vsel %vm544, %v2081, %v2082
      %v2084 = vrot.slane %v2074, 4
      %v2085 = vrot.slane %v2076, 4
      %v2086 = vsel %vm544, %v2084, %v2085
      %v2091 = vsel %vm544, %v2082, 0.0
      %v2092 = vadd.f32 %v2083, %v2091
      %v2093 = vrot.slane %v2092, 4
      %v2094 = vadd.f32 %v2092, %v2093
      %v2095 = vrot.slane %v2094, 2
      %v2096 = vadd.f32 %v2094, %v2095
      %v2097 = vrot.slane %v2096, 1
      %v2098 = vadd.f32 %v2096, %v2097
      %v2099 = vsel %vm544, %v2085, 0.0
      %v2100 = vadd.f32 %v2086, %v2099
      %v2101 = vrot.slane %v2100, 4
      %v2102 = vadd.f32 %v2100, %v2101
      %v2103 = vrot.slane %v2102, 2
      %v2104 = vadd.f32 %v2102, %v2103
      %v2105 = vrot.slane %v2104, 1
      %v2106 = vadd.f32 %v2104, %v2105
      %v2107 = vmul.f32 %v2098, %v561
      %v2108 = vmul.f32 %v2106, %v561
      %v2109 = vmax.f32 %v2049, %v2107
      %v2110 = vmax.f32 %v2050, %v2108
      %v2111 = vsub.f32 %v518, %v1773
      %v2112 = vsub.f32 %v519, %v1774
      %v2113 = vsub.f32 %v520, %v1775
      %v2114 = vsub.f32 %v521, %v1776
      %v2115 = vand.u32 2147483647, %v2111
      %v2116 = vand.u32 2147483647, %v2112
      %v2117 = vand.u32 2147483647, %v2113
      %v2118 = vand.u32 2147483647, %v2114
      %v2119 = vsub.f32 0.0, %v2115
      %v2120 = vsub.f32 0.0, %v2116
      %v2121 = vsub.f32 0.0, %v2117
      %v2122 = vsub.f32 0.0, %v2118
      %v2123 = vsel %vm544, %v2121, 0.0
      %v2124 = vadd.f32 %v2119, %v2123
      %v2125 = vrot.slane %v2124, 4
      %v2126 = vadd.f32 %v2124, %v2125
      %v2127 = vrot.slane %v2126, 2
      %v2128 = vadd.f32 %v2126, %v2127
      %v2129 = vrot.slane %v2128, 1
      %v2130 = vadd.f32 %v2128, %v2129
      %v2131 = vsel %vm544, %v2122, 0.0
      %v2132 = vadd.f32 %v2120, %v2131
      %v2133 = vrot.slane %v2132, 4
      %v2134 = vadd.f32 %v2132, %v2133
      %v2135 = vrot.slane %v2134, 2
      %v2136 = vadd.f32 %v2134, %v2135
      %v2137 = vrot.slane %v2136, 1
      %v2138 = vadd.f32 %v2136, %v2137
      %v2139 = vmul.f32 %v2130, %v561
      %v2140 = vmul.f32 %v2138, %v561
      %v2141 = vmax.f32 %v2109, %v2139
      %v2142 = vmax.f32 %v2110, %v2140
      %s2143 = scalar_lea.vmem %s464, 3
      %v2144 = vld [vmem:[%s2143] ss:$4 sm:$0x3]
      %s2145 = scalar_lea.vmem %s474, 3
      %v2146 = vld [vmem:[%s2145] ss:$4 sm:$0x3]
      %v2147 = vmax.f32 %v1708, %v2141
      %v2148 = vmax.f32 %v1709, %v2142
      %v2149 = vsub.f32 %v1708, %v2147
      %v2150 = vsub.f32 %v1709, %v2148
      %v2151 = vmul.f32 %v2149, 1000.0
      %v2152 = vmul.f32 %v2150, 1000.0
      %v2153 = vmul.f32 %v2151, 1.442695
      %v2154 = vpow.pop %v2153
      %v2155 = vmul.f32 %v2152, 1.442695
      %v2156 = vpow.pop %v2155
      %v2157 = vsub.f32 %v2141, %v2147
      %v2158 = vsub.f32 %v2142, %v2148
      %v2159 = vmul.f32 %v2157, 1000.0
      %v2160 = vmul.f32 %v2158, 1000.0
      %v2161 = vmul.f32 %v2159, 1.442695
      %v2162 = vpow.pop %v2161
      %v2163 = vmul.f32 %v2160, 1.442695
      %v2164 = vpow.pop %v2163
      %v2165 = vmul.f32 %v1728, %v2154
      %v2166 = vmul.f32 %v1729, %v2156
      %v2167 = vadd.f32 %v2165, %v2162
      %v2168 = vadd.f32 %v2166, %v2164
      %v2171 = vcombine.low %v2154, %v2156
      %v2173 = vunpack.c.l.s4 1966171168
      %v2174 = vunpack.c.0.s8 %v2173
      %v2175 = vlaneseq
      %v2176 = vshrl.u32 %v2175, 7
      %v2177 = vsub.s32 %v2174, %v2176
      %v2178 = vrot.slane %v2171, %v2177
      %v2180 = vunpack.c.l.s4 1966171168
      %v2181 = vunpack.c.0.s8 %v2180
      %v2182 = vlaneseq
      %v2183 = vshrl.u32 %v2182, 7
      %v2184 = vsub.s32 %v2181, %v2183
      %v2185 = vrot.slane %v2178, %v2184
      %v2187 = vmul.f32 %v1768, %v2185
      %v2190 = vcombine.low %v2162, %v2164
      %v2192 = vunpack.c.l.s4 1966171168
      %v2193 = vunpack.c.0.s8 %v2192
      %v2194 = vlaneseq
      %v2195 = vshrl.u32 %v2194, 7
      %v2196 = vsub.s32 %v2193, %v2195
      %v2197 = vrot.slane %v2190, %v2196
      %v2199 = vunpack.c.l.s4 1966171168
      %v2200 = vunpack.c.0.s8 %v2199
      %v2201 = vlaneseq
      %v2202 = vshrl.u32 %v2201, 7
      %v2203 = vsub.s32 %v2200, %v2202
      %v2204 = vrot.slane %v2197, %v2203
      %v2206 = vmul.f32 %v2144, %v2204
      %v2207 = vadd.f32 %v2187, %v2206
      %v2208 = vmul.f32 %v1771, %v2185
      %v2209 = vmul.f32 %v2146, %v2204
      %v2210 = vadd.f32 %v2208, %v2209
      %v2211 = vrcp.pop %v2167
      %v2212 = vmul.f32 1.0, %v2211
      %v2213 = vrcp.pop %v2168
      %v2214 = vmul.f32 1.0, %v2213
      %v2217 = vcombine.low %v2212, %v2214
      %v2219 = vunpack.c.l.s4 1966171168
      %v2220 = vunpack.c.0.s8 %v2219
      %v2221 = vlaneseq
      %v2222 = vshrl.u32 %v2221, 7
      %v2223 = vsub.s32 %v2220, %v2222
      %v2224 = vrot.slane %v2217, %v2223
      %v2226 = vunpack.c.l.s4 1966171168
      %v2227 = vunpack.c.0.s8 %v2226
      %v2228 = vlaneseq
      %v2229 = vshrl.u32 %v2228, 7
      %v2230 = vsub.s32 %v2227, %v2229
      %v2231 = vrot.slane %v2224, %v2230
      %v2233 = vmul.f32 %v2207, %v2231
      %v2234 = vmul.f32 %v2210, %v2231
      %v2235 = vld [vmem:[%s483] sm:$0x3]
      %v2236 = vld [vmem:[%s492] sm:$0x3]
      %v2237 = vadd.f32 %v2233, %v2235
      %v2238 = vmax.f32 %v2237, 0.0
      %v2239 = vmin.f32 %v2238, 15.0
      %v2240 = vsub.f32 %v2239, %v2235
      %v2241 = vlaneseq
      %vm2242 = vcmp.ge.s32.totalorder %v2241, 0
      %vm2243 = vcmp.lt.s32.totalorder %v2241, 256
      %vm2244 = vmand %vm2242, %vm2243
      %2245 = vst.msk [vmem:[%s501] sm:$0x3] %vm2244, %v2240
      %v2246 = vadd.f32 %v2234, %v2236
      %v2247 = vmax.f32 %v2246, 0.0
      %v2248 = vmin.f32 %v2247, 15.0
      %v2249 = vsub.f32 %v2248, %v2236
      %2250 = vst.msk [vmem:[%s510] sm:$0x3] %vm2244, %v2249
      %s2251 = smul.u32 2, %s24
      %p2252 = scmp.lt.s32.totalorder %s23, 1
      %s2253 = scalar_select %p2252, %s23, 1
      %p2254 = scmp.lt.s32.totalorder %s2251, 1
      %s2255 = scalar_select %p2254, %s2251, 1
      %s2256 = smul.addr %s2253, 2
      %s2257 = sadd.s32 %s2255, %s2256
      %s2258 = scalar_lea.vmem %s6, %s2257
      %s2259 = smul.u32 2, %s24
      %p2260 = scmp.lt.s32.totalorder %s23, 1
      %s2261 = scalar_select %p2260, %s23, 1
      %p2262 = scmp.lt.s32.totalorder %s2259, 1
      %s2263 = scalar_select %p2262, %s2259, 1
      %s2264 = smul.addr %s2261, 2
      %s2265 = sadd.s32 %s2263, %s2264
      %s2266 = scalar_lea.vmem %s7, %s2265
      // Predicated region
      $region45: #{evaluate_zm.1} parent=43 // pred_check
        %p2267 = pneg %p219
      $region46: #{evaluate_zm.1} parent=43 // pred_check_branch
        %2269 = sbr.rel (%p2267) target = $region48
      $region47: #{evaluate_zm.1} parent=43 // pred_region
        %s2270 = smul.u32 2, %s24
      $region48: #{evaluate_zm.1} parent=43 // pred_fallthru
        _
      // Predicated region
      $region49: #{evaluate_zm.1} parent=43 // pred_check
        %p2271 = pneg %p247
      $region50: #{evaluate_zm.1} parent=43 // pred_check_branch
        %2273 = sbr.rel (%p2271) target = $region52
      $region51: #{evaluate_zm.1} parent=43 // pred_region
        %s2274 = smul.u32 2, %s24
      $region52: #{evaluate_zm.1} parent=43 // pred_fallthru
        _
    $region44: #{evaluate_zm.1} parent=5 // pred_fallthru
      _
    %p2275 = scmp.le.s32.totalorder 2, %s14
    // Predicated region
    $region53: #{evaluate_zm.1} parent=5 // pred_check
      %p2276 = pneg %p2275
    $region54: #{evaluate_zm.1} parent=5 // pred_check_branch
      %2278 = sbr.rel (%p2276) target = $region56
    $region55: #{evaluate_zm.1} parent=5 // pred_region
      %s2279 = ssub.s32 %s14, 2
      // Predicated region
      $region57: #{evaluate_zm.1} parent=55 // pred_check
        %p2280 = pneg %p225
      $region58: #{evaluate_zm.1} parent=55 // pred_check_branch
        %2282 = sbr.rel (%p2280) target = $region60
      $region59: #{evaluate_zm.1} parent=55 // pred_region
        %s2283 = smul.u32 2, %s26
        %p2284 = scmp.lt.s32.totalorder %s25, 1
        %s2285 = scalar_select %p2284, %s25, 1
        %p2286 = scmp.lt.s32.totalorder %s2283, 1
        %s2287 = scalar_select %p2286, %s2283, 1
        %s2288 = smul.addr %s2285, 2
        %s2289 = sadd.s32 %s2287, %s2288
        %s2290 = scalar_lea.vmem %s6, %s2289
      $region60: #{evaluate_zm.1} parent=55 // pred_fallthru
        _
      // Predicated region
      $region61: #{evaluate_zm.1} parent=55 // pred_check
        %p2291 = pneg %p253
      $region62: #{evaluate_zm.1} parent=55 // pred_check_branch
        %2293 = sbr.rel (%p2291) target = $region64
      $region63: #{evaluate_zm.1} parent=55 // pred_region
        %s2294 = smul.u32 2, %s26
        %p2295 = scmp.lt.s32.totalorder %s25, 1
        %s2296 = scalar_select %p2295, %s25, 1
        %p2297 = scmp.lt.s32.totalorder %s2294, 1
        %s2298 = scalar_select %p2297, %s2294, 1
        %s2299 = smul.addr %s2296, 2
        %s2300 = sadd.s32 %s2298, %s2299
        %s2301 = scalar_lea.vmem %s7, %s2300
      $region64: #{evaluate_zm.1} parent=55 // pred_fallthru
        _
    $region56: #{evaluate_zm.1} parent=5 // pred_fallthru
      _
  $region6: #{evaluate_zm.1} parent=0 // loop_footer
    %s18 = sadd.s32 1, %s14
  $region7: #{evaluate_zm.1} parent=0 // loop_footer_branch
    %13 = sbr.rel target = $region3
  $region8: #{evaluate_zm.1} parent=0 // loop_exit
    _

</llo_original>
